<compile_context>
chip_gen: v7x
topology: tpu7x:2x2x1
jax: 0.10.0
libtpu: 0.0.40
codegen_flags: <defaults>
</compile_context>

<pallas_src>
import math

import jax
import jax.numpy as jnp
from jax.experimental import pallas as pl
from jax.experimental.pallas import tpu as pltpu


_NEG_INF = -1e30  # finite "-inf" used for padded vocab columns (bias padding)


def _round_up(x, m):
    return (x + m - 1) // m * m


# ---------------------------------------------------------------------------
# Fused single-pass kernel: whole (padded) vocab fits in one lane tile.
# ---------------------------------------------------------------------------
def _fused_kernel(x_ref, w_ref, b_ref, o_ref):
    logits = (
        jnp.dot(x_ref[...], w_ref[...], preferred_element_type=jnp.float32)
        + b_ref[...]
    )
    m = jnp.max(logits, axis=-1, keepdims=True)
    shifted = logits - m
    lse = jnp.log(jnp.sum(jnp.exp(shifted), axis=-1, keepdims=True))
    o_ref[...] = (shifted - lse).astype(o_ref.dtype)


# ---------------------------------------------------------------------------
# Two-pass path, pass 1: online logsumexp over vocab tiles -> (N, 1) lse.
# grid = (row_tiles, vocab_tiles); vocab is the (inner) reduction axis.
# ---------------------------------------------------------------------------
def _lse_kernel(x_ref, w_ref, b_ref, lse_ref, m_sc, l_sc):
    j = pl.program_id(1)

    @pl.when(j == 0)
    def _():
        m_sc[...] = jnp.full_like(m_sc, -jnp.inf)
        l_sc[...] = jnp.zeros_like(l_sc)

    logits = (
        jnp.dot(x_ref[...], w_ref[...], preferred_element_type=jnp.float32)
        + b_ref[...]
    )
    m_new = jnp.maximum(m_sc[...], jnp.max(logits, axis=-1, keepdims=True))
    alpha = jnp.exp(m_sc[...] - m_new)  # (tm, 1) rescale only — cheap on EUP
    l_sc[...] = alpha * l_sc[...] + jnp.sum(
        jnp.exp(logits - m_new), axis=-1, keepdims=True
    )
    m_sc[...] = m_new

    @pl.when(j == pl.num_programs(1) - 1)
    def _():
        lse_ref[...] = m_sc[...] + jnp.log(l_sc[...])


# ---------------------------------------------------------------------------
# Two-pass path, pass 2: recompute logits tile, subtract lse, write output.
# grid = (vocab_tiles, row_tiles): vocab OUTER so each W slab is reused
# across all row tiles (W is streamed from HBM exactly once per sweep).
# ---------------------------------------------------------------------------
def _normalize_kernel(x_ref, w_ref, b_ref, lse_ref, o_ref):
    logits = (
        jnp.dot(x_ref[...], w_ref[...], preferred_element_type=jnp.float32)
        + b_ref[...]
    )
    o_ref[...] = (logits - lse_ref[...]).astype(o_ref.dtype)


def project_forward(x, w, b, *, tm=256, tv=2048,
                    compute_dtype=jnp.bfloat16, out_dtype=None):
    """log_softmax(x @ w + b, axis=-1).

    x: (..., d_model), w: (d_model, vocab)  (transposed vs. torch Linear.weight),
    b: (vocab,).  Returns (..., vocab) in `out_dtype` (default: x.dtype).
    """
    d_model = x.shape[-1]
    vocab = w.shape[1]
    n = math.prod(x.shape[:-1])
    out_dtype = out_dtype or x.dtype

    # Tile sizes: large MXU/HBM-friendly tiles, clamped for tiny problems.
    tm = min(tm, _round_up(n, 128))
    tv = min(tv, _round_up(vocab, 128))
    n_pad = _round_up(n, tm)
    v_pad = _round_up(vocab, tv)
    n_tiles, v_tiles = n_pad // tm, v_pad // tv

    # bf16 matmul operands (halves x/W DMA bytes); bias + softmax math in f32.
    x2d = x.reshape(n, d_model).astype(compute_dtype)
    wc = w.astype(compute_dtype)
    bf = b.astype(jnp.float32)
    if n_pad != n:
        x2d = jnp.pad(x2d, ((0, n_pad - n), (0, 0)))
    if v_pad != vocab:
        wc = jnp.pad(wc, ((0, 0), (0, v_pad - vocab)))
        bf = jnp.pad(bf, ((0, v_pad - vocab),), constant_values=_NEG_INF)
    b2d = bf.reshape(1, v_pad)

    # Explicit VMEM budget (double-buffered tiles + f32 logits), capped at
    # 64 MiB so the same tiling stays legal on v7x.
    in_bytes = jnp.dtype(compute_dtype).itemsize
    out_bytes = jnp.dtype(out_dtype).itemsize
    vmem_need = 2 * (tm * d_model * in_bytes + d_model * tv * in_bytes
                     + tv * 4 + tm * tv * max(out_bytes, 4) + tm * 4)
    vmem_limit = int(min(max(2 * vmem_need, 32 << 20), 64 << 20))

    cost = pl.CostEstimate(
        flops=2 * n_pad * d_model * v_pad,
        transcendentals=n_pad * v_pad,
        bytes_accessed=(n_pad * d_model * in_bytes
                        + d_model * v_pad * in_bytes
                        + n_pad * v_pad * out_bytes),
    )

    if v_tiles == 1:
        # Small vocab: fused single-pass kernel (no recompute).
        out2d = pl.pallas_call(
            _fused_kernel,
            out_shape=jax.ShapeDtypeStruct((n_pad, v_pad), out_dtype),
            grid_spec=pltpu.PrefetchScalarGridSpec(
                num_scalar_prefetch=0,
                grid=(n_tiles,),
                in_specs=[
                    pl.BlockSpec((tm, d_model), lambda i: (i, 0)),
                    pl.BlockSpec((d_model, tv), lambda i: (0, 0)),
                    pl.BlockSpec((1, tv), lambda i: (0, 0)),
                ],
                out_specs=pl.BlockSpec((tm, tv), lambda i: (i, 0)),
            ),
            compiler_params=pltpu.CompilerParams(
                dimension_semantics=("parallel",),
                vmem_limit_bytes=vmem_limit),
            cost_estimate=cost,
        )(x2d, wc, b2d)
    else:
        # Pass 1: per-row logsumexp (vocab = inner "arbitrary" reduction axis).
        lse = pl.pallas_call(
            _lse_kernel,
            out_shape=jax.ShapeDtypeStruct((n_pad, 1), jnp.float32),
            grid_spec=pltpu.PrefetchScalarGridSpec(
                num_scalar_prefetch=0,
                grid=(n_tiles, v_tiles),
                in_specs=[
                    pl.BlockSpec((tm, d_model), lambda i, j: (i, 0)),
                    pl.BlockSpec((d_model, tv), lambda i, j: (0, j)),
                    pl.BlockSpec((1, tv), lambda i, j: (0, j)),
                ],
                out_specs=pl.BlockSpec((tm, 1), lambda i, j: (i, 0)),
                scratch_shapes=[pltpu.VMEM((tm, 1), jnp.float32),
                                pltpu.VMEM((tm, 1), jnp.float32)],
            ),
            compiler_params=pltpu.CompilerParams(
                dimension_semantics=("parallel", "arbitrary"),
                vmem_limit_bytes=vmem_limit),
            cost_estimate=cost,
        )(x2d, wc, b2d)

        # Pass 2: normalize.  vocab outer -> each W slab reused across rows.
        out2d = pl.pallas_call(
            _normalize_kernel,
            out_shape=jax.ShapeDtypeStruct((n_pad, v_pad), out_dtype),
            grid_spec=pltpu.PrefetchScalarGridSpec(
                num_scalar_prefetch=0,
                grid=(v_tiles, n_tiles),
                in_specs=[
                    pl.BlockSpec((tm, d_model), lambda j, i: (i, 0)),
                    pl.BlockSpec((d_model, tv), lambda j, i: (0, j)),
                    pl.BlockSpec((1, tv), lambda j, i: (0, j)),
                    pl.BlockSpec((tm, 1), lambda j, i: (i, 0)),
                ],
                out_specs=pl.BlockSpec((tm, tv), lambda j, i: (i, j)),
            ),
            compiler_params=pltpu.CompilerParams(
                dimension_semantics=("parallel", "parallel"),
                vmem_limit_bytes=vmem_limit),
            cost_estimate=cost,
        )(x2d, wc, b2d, lse)

    out2d = out2d[:n, :vocab]
    return out2d.reshape(*x.shape[:-1], vocab)


if __name__ == "__main__":
    # Small shapes (ragged on purpose: n=24 rows, vocab=1000 not a multiple
    # of 128) to exercise the padding path and both kernel paths.
    batch, seq, d_model, vocab = 2, 12, 64, 1000

    key = jax.random.PRNGKey(0)
    kx, kw, kb = jax.random.split(key, 3)
    bound = 1.0 / math.sqrt(d_model)
    # w is stored transposed relative to PyTorch: (d_model, vocab).
    w = jax.random.uniform(kw, (d_model, vocab), jnp.float32, -bound, bound)
    b = jax.random.uniform(kb, (vocab,), jnp.float32, -bound, bound)
    x = jax.random.normal(kx, (batch, seq, d_model), jnp.float32)

    # Fused path (single vocab tile) and tiled two-pass path (vocab split).
    out_fused = jax.block_until_ready(project_forward(x, w, b))
    out_tiled = jax.block_until_ready(project_forward(x, w, b, tv=512))

    # References: exact f32 (loose tol, bf16 MXU operands) and a bf16-operand
    # reference (tight tol).
    ref_f32 = jax.nn.log_softmax(x @ w + b, axis=-1)
    x_bf = x.astype(jnp.bfloat16).astype(jnp.float32)
    w_bf = w.astype(jnp.bfloat16).astype(jnp.float32)
    ref_bf16 = jax.nn.log_softmax(x_bf @ w_bf + b, axis=-1)

    for out in (out_fused, out_tiled):
        assert out.shape == (batch, seq, vocab)
        assert jnp.allclose(out, ref_bf16, atol=2e-3, rtol=2e-3)
        assert jnp.allclose(out, ref_f32, atol=5e-2, rtol=5e-2)

    print("KERNEL_OK")
</pallas_src>

<mosaic_0001>
module attributes {stable_mosaic.version = 11 : i64} {
  func.func @_fused_kernel(%arg0: i32, %arg1: memref<128x64xbf16, #tpu.memory_space<vmem>>, %arg2: memref<64x1024xbf16, #tpu.memory_space<vmem>>, %arg3: memref<1x1024xf32, #tpu.memory_space<vmem>>, %arg4: memref<128x1024xf32, #tpu.memory_space<vmem>>) attributes {dimension_semantics = [#tpu.dimension_semantics<parallel>], iteration_bounds = array<i64: 1>, scalar_prefetch = 0 : i64, scratch_operands = 0 : i64, tpu.core_type = #tpu.core_type<tc>, window_params = [{transform_indices = @transform_0, window_bounds = array<i64: 128, 64>}, {pipeline_mode = #tpu.pipeline_mode<synchronous>, transform_indices = @transform_1, window_bounds = array<i64: 64, 1024>}, {pipeline_mode = #tpu.pipeline_mode<synchronous>, transform_indices = @transform_2, window_bounds = array<i64: 1, 1024>}, {transform_indices = @transform_3, window_bounds = array<i64: 128, 1024>}]} {
    %c0 = arith.constant 0 : index
    %c0_0 = arith.constant 0 : index
    %0 = vector.load %arg1[%c0, %c0_0] : memref<128x64xbf16, #tpu.memory_space<vmem>>, vector<128x64xbf16>
    %c0_1 = arith.constant 0 : index
    %c0_2 = arith.constant 0 : index
    %1 = vector.load %arg2[%c0_1, %c0_2] : memref<64x1024xbf16, #tpu.memory_space<vmem>>, vector<64x1024xbf16>
    %cst = arith.constant dense<0.000000e+00> : vector<128x1024xf32>
    %2 = tpu.matmul %0, %1, %cst {dimension_numbers = #tpu.dot_dimension_numbers<[1], [0], [0], [1], [0, 0, 1, 1], [], []>} : vector<128x64xbf16>, vector<64x1024xbf16>, vector<128x1024xf32> -> vector<128x1024xf32>
    %c0_3 = arith.constant 0 : index
    %c0_4 = arith.constant 0 : index
    %3 = vector.load %arg3[%c0_3, %c0_4] : memref<1x1024xf32, #tpu.memory_space<vmem>>, vector<1x1024xf32>
    %4 = vector.broadcast %3 : vector<1x1024xf32> to vector<128x1024xf32>
    %5 = arith.addf %2, %4 : vector<128x1024xf32>
    %cst_5 = arith.constant dense<0xFF800000> : vector<128xf32>
    %6 = vector.multi_reduction <maximumf>, %5, %cst_5 [1] : vector<128x1024xf32> to vector<128xf32>
    %7 = vector.shape_cast %6 : vector<128xf32> to vector<128x1xf32>
    %8 = vector.broadcast %7 : vector<128x1xf32> to vector<128x1024xf32>
    %9 = arith.subf %5, %8 : vector<128x1024xf32>
    %10 = math.exp %9 : vector<128x1024xf32>
    %cst_6 = arith.constant dense<0.000000e+00> : vector<128xf32>
    %11 = vector.multi_reduction <add>, %10, %cst_6 [1] : vector<128x1024xf32> to vector<128xf32>
    %12 = vector.shape_cast %11 : vector<128xf32> to vector<128x1xf32>
    %13 = math.log %12 : vector<128x1xf32>
    %14 = vector.broadcast %13 : vector<128x1xf32> to vector<128x1024xf32>
    %15 = arith.subf %9, %14 : vector<128x1024xf32>
    %c0_7 = arith.constant 0 : index
    %c0_8 = arith.constant 0 : index
    %16 = vector.load %arg4[%c0_7, %c0_8] : memref<128x1024xf32, #tpu.memory_space<vmem>>, vector<128x1024xf32>
    tpu.vector_store %arg4[%c0_7, %c0_8], %15 {strides = array<i32>} : memref<128x1024xf32, #tpu.memory_space<vmem>>, vector<128x1024xf32>,
    return
  }
  func.func @transform_0(%arg0: i32) -> (i32, i32) {
    %c0_i32 = arith.constant 0 : i32
    %c0_i32_0 = arith.constant 0 : i32
    return %arg0, %c0_i32 : i32, i32
  }
  func.func @transform_1(%arg0: i32) -> (i32, i32) {
    %c0_i32 = arith.constant 0 : i32
    %c0_i32_0 = arith.constant 0 : i32
    %c0_i32_1 = arith.constant 0 : i32
    return %c0_i32, %c0_i32_0 : i32, i32
  }
  func.func @transform_2(%arg0: i32) -> (i32, i32) {
    %c0_i32 = arith.constant 0 : i32
    %c0_i32_0 = arith.constant 0 : i32
    %c0_i32_1 = arith.constant 0 : i32
    return %c0_i32, %c0_i32_0 : i32, i32
  }
  func.func @transform_3(%arg0: i32) -> (i32, i32) {
    %c0_i32 = arith.constant 0 : i32
    %c0_i32_0 = arith.constant 0 : i32
    return %arg0, %c0_i32 : i32, i32
  }
}

</mosaic_0001>

<llo_original>
// kernel: tpu_custom_call.1
$region0: #{tpu_custom_call.1}
  #allocation0 [shape = 'u32[]', space=smem, size = 0x4, offset = 0x4, fixed_abs, tag = 'smem constant byte address 0x4 - core index']
  #allocation1 [shape = 'u32[144,128]{1,0:T(1,128)}', space=vmem, size = 0x12000, scoped, tag = 'internal scratch']
  %s0 = inlined_call_operand.vmem [shape: bf16[128,64], index: 0, kind: input, shape index: {}]
  %s1 = inlined_call_operand.hbm [shape: bf16[64,1024], index: 1, kind: input, shape index: {}]
  %s2 = inlined_call_operand.vmem [shape: f32[1,1024], index: 2, kind: input, shape index: {}]
  %s3 = inlined_call_operand.hbm [shape: f32[128,1024], index: 3, kind: output, shape index: {}]
  %s4 = sld [smem:[#allocation0]]
  $region26: #{tpu_custom_call.1} parent=0
    _
  %s6 = ssub.s32 1, %s4
  %s7 = scalar_select 0, %s6, %s4
  $region1: #{tpu_custom_call.1} parent=0
    #allocation2 [shape = 'u8[131072]{0}', space=vmem, size = 0x20000, scoped, tag = 'input window, operand 1, single buffered']
    #allocation3 [shape = 's32[1]{0}', space=sflag, size = 0x4, scoped, tag = 'scoped memory for tpu_custom_call.1']
    #allocation4 [shape = 's32[1]{0}', space=sflag, size = 0x4, scoped, tag = 'scoped memory for tpu_custom_call.1']
    #allocation5 [shape = 'u8[524288]{0}', space=vmem, size = 0x80000, scoped, tag = 'output window, operand 0, single buffered']
    %8 = vsyncpa [#allocation3], 0
    %9 = vsyncpa [#allocation4], 0
    // Predicated region
    $region2: #{tpu_custom_call.1} parent=1 // pred_check
      _
    $region3: #{tpu_custom_call.1} parent=1 // pred_check_branch
      %11 = sbr.rel (0) target = $region5
    $region4: #{tpu_custom_call.1} parent=1 // pred_region
      _
    $region5: #{tpu_custom_call.1} parent=1 // pred_fallthru
      _
    // Predicated region
    $region6: #{tpu_custom_call.1} parent=1 // pred_check
      _
    $region7: #{tpu_custom_call.1} parent=1 // pred_check_branch
      %13 = sbr.rel (0) target = $region9
    $region8: #{tpu_custom_call.1} parent=1 // pred_region
      %s15 = ssub.s32 4096, 4096
      %16 = vsyncadd [#allocation3], %s15
      %s17 = sshll.u32 [#allocation2], 4
      %s18 = int_to_ptr.vmem [resolvable:$true] %s17
      %23 = dma.hbm_to_vmem [thread:$0]  %s1, 4096, %s18, [#allocation3], 512, 512, 32
    $region9: #{tpu_custom_call.1} parent=1 // pred_fallthru
      _
    // Predicated region
    $region10: #{tpu_custom_call.1} parent=1 // pred_check
      _
    $region11: #{tpu_custom_call.1} parent=1 // pred_check_branch
      %25 = sbr.rel (0) target = $region13
    $region12: #{tpu_custom_call.1} parent=1 // pred_region
      _
    $region13: #{tpu_custom_call.1} parent=1 // pred_fallthru
      _
    // Predicated region
    $region14: #{tpu_custom_call.1} parent=1 // pred_check
      _
    $region15: #{tpu_custom_call.1} parent=1 // pred_check_branch
      %27 = sbr.rel (0) target = $region17
    $region16: #{tpu_custom_call.1} parent=1 // pred_region
      %28 = dma.done [#allocation3], 4096
    $region17: #{tpu_custom_call.1} parent=1 // pred_fallthru
      _
    %v30 = vld [vmem:[%s0] sm:$0xf]
    %v31 = vld [vmem:[%s0 + $0x4] sm:$0xf]
    %v32 = vld [vmem:[%s0 + $0x8] sm:$0xf]
    %v33 = vld [vmem:[%s0 + $0xc] sm:$0xf]
    %v34 = vld [vmem:[%s0 + $0x10] sm:$0xf]
    %v35 = vld [vmem:[%s0 + $0x14] sm:$0xf]
    %v36 = vld [vmem:[%s0 + $0x18] sm:$0xf]
    %v37 = vld [vmem:[%s0 + $0x1c] sm:$0xf]
    %v38 = vld [vmem:[%s0 + $0x20] sm:$0xf]
    %v39 = vld [vmem:[%s0 + $0x24] sm:$0xf]
    %v40 = vld [vmem:[%s0 + $0x28] sm:$0xf]
    %v41 = vld [vmem:[%s0 + $0x2c] sm:$0xf]
    %v42 = vld [vmem:[%s0 + $0x30] sm:$0xf]
    %v43 = vld [vmem:[%s0 + $0x34] sm:$0xf]
    %v44 = vld [vmem:[%s0 + $0x38] sm:$0xf]
    %v45 = vld [vmem:[%s0 + $0x3c] sm:$0xf]
    %v46 = vld [vmem:[#allocation2] sm:$0xff]
    %v47 = vld [vmem:[#allocation2 + $0x8] sm:$0xff]
    %v48 = vld [vmem:[#allocation2 + $0x10] sm:$0xff]
    %v49 = vld [vmem:[#allocation2 + $0x18] sm:$0xff]
    %v50 = vld [vmem:[#allocation2 + $0x20] sm:$0xff]
    %v51 = vld [vmem:[#allocation2 + $0x28] sm:$0xff]
    %v52 = vld [vmem:[#allocation2 + $0x30] sm:$0xff]
    %v53 = vld [vmem:[#allocation2 + $0x38] sm:$0xff]
    %v54 = vld [vmem:[#allocation2 + $0x40] sm:$0xff]
    %v55 = vld [vmem:[#allocation2 + $0x48] sm:$0xff]
    %v56 = vld [vmem:[#allocation2 + $0x50] sm:$0xff]
    %v57 = vld [vmem:[#allocation2 + $0x58] sm:$0xff]
    %v58 = vld [vmem:[#allocation2 + $0x60] sm:$0xff]
    %v59 = vld [vmem:[#allocation2 + $0x68] sm:$0xff]
    %v60 = vld [vmem:[#allocation2 + $0x70] sm:$0xff]
    %v61 = vld [vmem:[#allocation2 + $0x78] sm:$0xff]
    %v62 = vld [vmem:[#allocation2 + $0x80] sm:$0xff]
    %v63 = vld [vmem:[#allocation2 + $0x88] sm:$0xff]
    %v64 = vld [vmem:[#allocation2 + $0x90] sm:$0xff]
    %v65 = vld [vmem:[#allocation2 + $0x98] sm:$0xff]
    %v66 = vld [vmem:[#allocation2 + $0xa0] sm:$0xff]
    %v67 = vld [vmem:[#allocation2 + $0xa8] sm:$0xff]
    %v68 = vld [vmem:[#allocation2 + $0xb0] sm:$0xff]
    %v69 = vld [vmem:[#allocation2 + $0xb8] sm:$0xff]
    %v70 = vld [vmem:[#allocation2 + $0xc0] sm:$0xff]
    %v71 = vld [vmem:[#allocation2 + $0xc8] sm:$0xff]
    %v72 = vld [vmem:[#allocation2 + $0xd0] sm:$0xff]
    %v73 = vld [vmem:[#allocation2 + $0xd8] sm:$0xff]
    %v74 = vld [vmem:[#allocation2 + $0xe0] sm:$0xff]
    %v75 = vld [vmem:[#allocation2 + $0xe8] sm:$0xff]
    %v76 = vld [vmem:[#allocation2 + $0xf0] sm:$0xff]
    %v77 = vld [vmem:[#allocation2 + $0xf8] sm:$0xff]
    %v78 = vld [vmem:[%s2] sm:$0xff]
    %v80 = vlaneseq
    %v81 = vshrl.u32 %v80, 7
    %v82 = vsub.s32 0, %v81
    %v83 = vrot.slane %v78, %v82
    %v84 = vlaneseq
    %v85 = vshrl.u32 %v84, 7
    %v86 = vsub.s32 1, %v85
    %v87 = vrot.slane %v78, %v86
    %v88 = vlaneseq
    %v89 = vshrl.u32 %v88, 7
    %v90 = vsub.s32 2, %v89
    %v91 = vrot.slane %v78, %v90
    %v92 = vlaneseq
    %v93 = vshrl.u32 %v92, 7
    %v94 = vsub.s32 3, %v93
    %v95 = vrot.slane %v78, %v94
    %v96 = vlaneseq
    %v97 = vshrl.u32 %v96, 7
    %v98 = vsub.s32 4, %v97
    %v99 = vrot.slane %v78, %v98
    %v100 = vlaneseq
    %v101 = vshrl.u32 %v100, 7
    %v102 = vsub.s32 5, %v101
    %v103 = vrot.slane %v78, %v102
    %v104 = vlaneseq
    %v105 = vshrl.u32 %v104, 7
    %v106 = vsub.s32 6, %v105
    %v107 = vrot.slane %v78, %v106
    %v108 = vlaneseq
    %v109 = vshrl.u32 %v108, 7
    %v110 = vsub.s32 7, %v109
    %v111 = vrot.slane %v78, %v110
    %v136 = vunpack.c.l.b16 %v30
    %v137 = vunpack.c.l.b16 %v31
    %v138 = vunpack.c.l.b16 %v32
    %v139 = vunpack.c.l.b16 %v33
    %v140 = vunpack.c.l.b16 %v34
    %v141 = vunpack.c.l.b16 %v35
    %v142 = vunpack.c.l.b16 %v36
    %v143 = vunpack.c.l.b16 %v37
    %v144 = vunpack.c.l.b16 %v38
    %v145 = vunpack.c.l.b16 %v39
    %v146 = vunpack.c.l.b16 %v40
    %v147 = vunpack.c.l.b16 %v41
    %v148 = vunpack.c.l.b16 %v42
    %v149 = vunpack.c.l.b16 %v43
    %v150 = vunpack.c.l.b16 %v44
    %v151 = vunpack.c.l.b16 %v45
    %v152 = vpack.c.b16 %v137, %v136
    %v153 = vpack.c.b16 %v139, %v138
    %v154 = vpack.c.b16 %v141, %v140
    %v155 = vpack.c.b16 %v143, %v142
    %v156 = vpack.c.b16 %v145, %v144
    %v157 = vpack.c.b16 %v147, %v146
    %v158 = vpack.c.b16 %v149, %v148
    %v159 = vpack.c.b16 %v151, %v150
    %v192 = vunpack.c.l.b16 %v46
    %v193 = vunpack.c.h.b16 %v46
    %v194 = vunpack.c.l.b16 %v47
    %v195 = vunpack.c.h.b16 %v47
    %v196 = vunpack.c.l.b16 %v48
    %v197 = vunpack.c.h.b16 %v48
    %v198 = vunpack.c.l.b16 %v49
    %v199 = vunpack.c.h.b16 %v49
    %v200 = vunpack.c.l.b16 %v50
    %v201 = vunpack.c.h.b16 %v50
    %v202 = vunpack.c.l.b16 %v51
    %v203 = vunpack.c.h.b16 %v51
    %v204 = vunpack.c.l.b16 %v52
    %v205 = vunpack.c.h.b16 %v52
    %v206 = vunpack.c.l.b16 %v53
    %v207 = vunpack.c.h.b16 %v53
    %v208 = vunpack.c.l.b16 %v54
    %v209 = vunpack.c.h.b16 %v54
    %v210 = vunpack.c.l.b16 %v55
    %v211 = vunpack.c.h.b16 %v55
    %v212 = vunpack.c.l.b16 %v56
    %v213 = vunpack.c.h.b16 %v56
    %v214 = vunpack.c.l.b16 %v57
    %v215 = vunpack.c.h.b16 %v57
    %v216 = vunpack.c.l.b16 %v58
    %v217 = vunpack.c.h.b16 %v58
    %v218 = vunpack.c.l.b16 %v59
    %v219 = vunpack.c.h.b16 %v59
    %v220 = vunpack.c.l.b16 %v60
    %v221 = vunpack.c.h.b16 %v60
    %v222 = vunpack.c.l.b16 %v61
    %v223 = vunpack.c.h.b16 %v61
    %v224 = vunpack.c.l.b16 %v62
    %v225 = vunpack.c.h.b16 %v62
    %v226 = vunpack.c.l.b16 %v63
    %v227 = vunpack.c.h.b16 %v63
    %v228 = vunpack.c.l.b16 %v64
    %v229 = vunpack.c.h.b16 %v64
    %v230 = vunpack.c.l.b16 %v65
    %v231 = vunpack.c.h.b16 %v65
    %v232 = vunpack.c.l.b16 %v66
    %v233 = vunpack.c.h.b16 %v66
    %v234 = vunpack.c.l.b16 %v67
    %v235 = vunpack.c.h.b16 %v67
    %v236 = vunpack.c.l.b16 %v68
    %v237 = vunpack.c.h.b16 %v68
    %v238 = vunpack.c.l.b16 %v69
    %v239 = vunpack.c.h.b16 %v69
    %v240 = vunpack.c.l.b16 %v70
    %v241 = vunpack.c.h.b16 %v70
    %v242 = vunpack.c.l.b16 %v71
    %v243 = vunpack.c.h.b16 %v71
    %v244 = vunpack.c.l.b16 %v72
    %v245 = vunpack.c.h.b16 %v72
    %v246 = vunpack.c.l.b16 %v73
    %v247 = vunpack.c.h.b16 %v73
    %v248 = vunpack.c.l.b16 %v74
    %v249 = vunpack.c.h.b16 %v74
    %v250 = vunpack.c.l.b16 %v75
    %v251 = vunpack.c.h.b16 %v75
    %v252 = vunpack.c.l.b16 %v76
    %v253 = vunpack.c.h.b16 %v76
    %v254 = vunpack.c.l.b16 %v77
    %v255 = vunpack.c.h.b16 %v77
    %v256 = vpack.c.b16 %v200, %v192
    %v257 = vpack.c.b16 %v201, %v193
    %v258 = vpack.c.b16 %v202, %v194
    %v259 = vpack.c.b16 %v203, %v195
    %v260 = vpack.c.b16 %v204, %v196
    %v261 = vpack.c.b16 %v205, %v197
    %v262 = vpack.c.b16 %v206, %v198
    %v263 = vpack.c.b16 %v207, %v199
    %v264 = vpack.c.b16 %v216, %v208
    %v265 = vpack.c.b16 %v217, %v209
    %v266 = vpack.c.b16 %v218, %v210
    %v267 = vpack.c.b16 %v219, %v211
    %v268 = vpack.c.b16 %v220, %v212
    %v269 = vpack.c.b16 %v221, %v213
    %v270 = vpack.c.b16 %v222, %v214
    %v271 = vpack.c.b16 %v223, %v215
    %v272 = vpack.c.b16 %v232, %v224
    %v273 = vpack.c.b16 %v233, %v225
    %v274 = vpack.c.b16 %v234, %v226
    %v275 = vpack.c.b16 %v235, %v227
    %v276 = vpack.c.b16 %v236, %v228
    %v277 = vpack.c.b16 %v237, %v229
    %v278 = vpack.c.b16 %v238, %v230
    %v279 = vpack.c.b16 %v239, %v231
    %v280 = vpack.c.b16 %v248, %v240
    %v281 = vpack.c.b16 %v249, %v241
    %v282 = vpack.c.b16 %v250, %v242
    %v283 = vpack.c.b16 %v251, %v243
    %v284 = vpack.c.b16 %v252, %v244
    %v285 = vpack.c.b16 %v253, %v245
    %v286 = vpack.c.b16 %v254, %v246
    %v287 = vpack.c.b16 %v255, %v247
    %vm320 = vcmask 523264
    %v322 = vsel %vm320, %v152, 0
    %v325 = vsel %vm320, %v153, 0
    %v328 = vsel %vm320, %v154, 0
    %v331 = vsel %vm320, %v155, 0
    %v334 = vsel %vm320, %v156, 0
    %v337 = vsel %vm320, %v157, 0
    %v340 = vsel %vm320, %v158, 0
    %v343 = vsel %vm320, %v159, 0
    %345 = vmatprep.subr.bf16.mxu0 %v257
    %346 = vmatpush1.bf16.msra.mxu0 %v256
    %347 = vmatprep.subr.bf16.mxu0 %v265
    %348 = vmatpush1.bf16.msra.mxu0 %v264
    %349 = vmatprep.subr.bf16.mxu0 %v273
    %350 = vmatpush1.bf16.msra.mxu0 %v272
    %351 = vmatprep.subr.bf16.mxu0 %v281
    %352 = vmatpush1.bf16.msra.mxu0 %v280
    %353 = vmatprep.subr.bf16.mxu0 0
    %354 = vmatpush1.bf16.msra.mxu0 0
    %355 = vmatprep.subr.bf16.mxu0 0
    %356 = vmatpush1.bf16.msra.mxu0 0
    %357 = vmatprep.subr.bf16.mxu0 0
    %358 = vmatpush1.bf16.msra.mxu0 0
    %359 = vmatprep.subr.bf16.mxu0 0
    %360 = vmatpush1.bf16.msra.mxu0 0
    %361 = vmatprep.subr.bf16.mxu0 0
    %362 = vmatpush1.bf16.msra.mxu0 0
    %363 = vmatprep.subr.bf16.mxu0 0
    %364 = vmatpush1.bf16.msra.mxu0 0
    %365 = vmatprep.subr.bf16.mxu0 0
    %366 = vmatpush1.bf16.msra.mxu0 0
    %367 = vmatprep.subr.bf16.mxu0 0
    %368 = vmatpush1.bf16.msra.mxu0 0
    %369 = vmatprep.subr.bf16.mxu0 0
    %370 = vmatpush1.bf16.msra.mxu0 0
    %371 = vmatprep.subr.bf16.mxu0 0
    %372 = vmatpush1.bf16.msra.mxu0 0
    %373 = vmatprep.subr.bf16.mxu0 0
    %374 = vmatpush1.bf16.msra.mxu0 0
    %375 = vmatprep.subr.bf16.mxu0 0
    %376 = vmatpush1.bf16.msra.mxu0 0
    %377 = vmatprep.mubr.bf16.mxu0 0
    %378 = vmatmul.mubr.bf16.gmra.mrb[0].mxu0 %v322
    %v379 = vpop.f32.mrb[0].mxu0
    %v380 = vadd.f32 %v83, %v379
    %v381 = vpop.f32.mrb[0].mxu0
    %v382 = vadd.f32 %v87, %v381
    %v383 = vpop.f32.mrb[0].mxu0
    %v384 = vadd.f32 %v83, %v383
    %v385 = vpop.f32.mrb[0].mxu0
    %v386 = vadd.f32 %v87, %v385
    %387 = vmatprep.mubr.bf16.mxu0 0
    %388 = vmatmul.mubr.bf16.gmra.mrb[0].mxu0 %v325
    %v389 = vpop.f32.mrb[0].mxu0
    %v390 = vadd.f32 %v83, %v389
    %v391 = vpop.f32.mrb[0].mxu0
    %v392 = vadd.f32 %v87, %v391
    %v393 = vpop.f32.mrb[0].mxu0
    %v394 = vadd.f32 %v83, %v393
    %v395 = vpop.f32.mrb[0].mxu0
    %v396 = vadd.f32 %v87, %v395
    %397 = vmatprep.mubr.bf16.mxu0 0
    %398 = vmatmul.mubr.bf16.gmra.mrb[0].mxu0 %v328
    %v399 = vpop.f32.mrb[0].mxu0
    %v400 = vadd.f32 %v83, %v399
    %v401 = vpop.f32.mrb[0].mxu0
    %v402 = vadd.f32 %v87, %v401
    %v403 = vpop.f32.mrb[0].mxu0
    %v404 = vadd.f32 %v83, %v403
    %v405 = vpop.f32.mrb[0].mxu0
    %v406 = vadd.f32 %v87, %v405
    %407 = vmatprep.mubr.bf16.mxu0 0
    %408 = vmatmul.mubr.bf16.gmra.mrb[0].mxu0 %v331
    %v409 = vpop.f32.mrb[0].mxu0
    %v410 = vadd.f32 %v83, %v409
    %v411 = vpop.f32.mrb[0].mxu0
    %v412 = vadd.f32 %v87, %v411
    %v413 = vpop.f32.mrb[0].mxu0
    %v414 = vadd.f32 %v83, %v413
    %v415 = vpop.f32.mrb[0].mxu0
    %v416 = vadd.f32 %v87, %v415
    %417 = vmatprep.mubr.bf16.mxu0 0
    %418 = vmatmul.mubr.bf16.gmra.mrb[0].mxu0 %v334
    %v419 = vpop.f32.mrb[0].mxu0
    %v420 = vadd.f32 %v83, %v419
    %v421 = vpop.f32.mrb[0].mxu0
    %v422 = vadd.f32 %v87, %v421
    %v423 = vpop.f32.mrb[0].mxu0
    %v424 = vadd.f32 %v83, %v423
    %v425 = vpop.f32.mrb[0].mxu0
    %v426 = vadd.f32 %v87, %v425
    %427 = vmatprep.mubr.bf16.mxu0 0
    %428 = vmatmul.mubr.bf16.gmra.mrb[0].mxu0 %v337
    %v429 = vpop.f32.mrb[0].mxu0
    %v430 = vadd.f32 %v83, %v429
    %v431 = vpop.f32.mrb[0].mxu0
    %v432 = vadd.f32 %v87, %v431
    %v433 = vpop.f32.mrb[0].mxu0
    %v434 = vadd.f32 %v83, %v433
    %v435 = vpop.f32.mrb[0].mxu0
    %v436 = vadd.f32 %v87, %v435
    %437 = vmatprep.mubr.bf16.mxu0 0
    %438 = vmatmul.mubr.bf16.gmra.mrb[0].mxu0 %v340
    %v439 = vpop.f32.mrb[0].mxu0
    %v440 = vadd.f32 %v83, %v439
    %v441 = vpop.f32.mrb[0].mxu0
    %v442 = vadd.f32 %v87, %v441
    %v443 = vpop.f32.mrb[0].mxu0
    %v444 = vadd.f32 %v83, %v443
    %v445 = vpop.f32.mrb[0].mxu0
    %v446 = vadd.f32 %v87, %v445
    %447 = vmatprep.mubr.bf16.mxu0 0
    %448 = vmatmul.mubr.bf16.gmra.mrb[0].mxu0 %v343
    %v449 = vpop.f32.mrb[0].mxu0
    %v450 = vadd.f32 %v83, %v449
    %v451 = vpop.f32.mrb[0].mxu0
    %v452 = vadd.f32 %v87, %v451
    %v453 = vpop.f32.mrb[0].mxu0
    %v454 = vadd.f32 %v83, %v453
    %v455 = vpop.f32.mrb[0].mxu0
    %v456 = vadd.f32 %v87, %v455
    %457 = vdwg.mxu0
    %458 = vmatprep.subr.bf16.mxu0 %v259
    %459 = vmatpush1.bf16.msra.mxu0 %v258
    %460 = vmatprep.subr.bf16.mxu0 %v267
    %461 = vmatpush1.bf16.msra.mxu0 %v266
    %462 = vmatprep.subr.bf16.mxu0 %v275
    %463 = vmatpush1.bf16.msra.mxu0 %v274
    %464 = vmatprep.subr.bf16.mxu0 %v283
    %465 = vmatpush1.bf16.msra.mxu0 %v282
    %466 = vmatprep.subr.bf16.mxu0 0
    %467 = vmatpush1.bf16.msra.mxu0 0
    %468 = vmatprep.subr.bf16.mxu0 0
    %469 = vmatpush1.bf16.msra.mxu0 0
    %470 = vmatprep.subr.bf16.mxu0 0
    %471 = vmatpush1.bf16.msra.mxu0 0
    %472 = vmatprep.subr.bf16.mxu0 0
    %473 = vmatpush1.bf16.msra.mxu0 0
    %474 = vmatprep.subr.bf16.mxu0 0
    %475 = vmatpush1.bf16.msra.mxu0 0
    %476 = vmatprep.subr.bf16.mxu0 0
    %477 = vmatpush1.bf16.msra.mxu0 0
    %478 = vmatprep.subr.bf16.mxu0 0
    %479 = vmatpush1.bf16.msra.mxu0 0
    %480 = vmatprep.subr.bf16.mxu0 0
    %481 = vmatpush1.bf16.msra.mxu0 0
    %482 = vmatprep.subr.bf16.mxu0 0
    %483 = vmatpush1.bf16.msra.mxu0 0
    %484 = vmatprep.subr.bf16.mxu0 0
    %485 = vmatpush1.bf16.msra.mxu0 0
    %486 = vmatprep.subr.bf16.mxu0 0
    %487 = vmatpush1.bf16.msra.mxu0 0
    %488 = vmatprep.subr.bf16.mxu0 0
    %489 = vmatpush1.bf16.msra.mxu0 0
    %490 = vmatprep.mubr.bf16.mxu0 0
    %491 = vmatmul.mubr.bf16.gmra.mrb[0].mxu0 %v322
    %v492 = vpop.f32.mrb[0].mxu0
    %v493 = vadd.f32 %v91, %v492
    %v494 = vpop.f32.mrb[0].mxu0
    %v495 = vadd.f32 %v95, %v494
    %v496 = vpop.f32.mrb[0].mxu0
    %v497 = vadd.f32 %v91, %v496
    %v498 = vpop.f32.mrb[0].mxu0
    %v499 = vadd.f32 %v95, %v498
    %500 = vmatprep.mubr.bf16.mxu0 0
    %501 = vmatmul.mubr.bf16.gmra.mrb[0].mxu0 %v325
    %v502 = vpop.f32.mrb[0].mxu0
    %v503 = vadd.f32 %v91, %v502
    %v504 = vpop.f32.mrb[0].mxu0
    %v505 = vadd.f32 %v95, %v504
    %v506 = vpop.f32.mrb[0].mxu0
    %v507 = vadd.f32 %v91, %v506
    %v508 = vpop.f32.mrb[0].mxu0
    %v509 = vadd.f32 %v95, %v508
    %510 = vmatprep.mubr.bf16.mxu0 0
    %511 = vmatmul.mubr.bf16.gmra.mrb[0].mxu0 %v328
    %v512 = vpop.f32.mrb[0].mxu0
    %v513 = vadd.f32 %v91, %v512
    %v514 = vpop.f32.mrb[0].mxu0
    %v515 = vadd.f32 %v95, %v514
    %v516 = vpop.f32.mrb[0].mxu0
    %v517 = vadd.f32 %v91, %v516
    %v518 = vpop.f32.mrb[0].mxu0
    %v519 = vadd.f32 %v95, %v518
    %520 = vmatprep.mubr.bf16.mxu0 0
    %521 = vmatmul.mubr.bf16.gmra.mrb[0].mxu0 %v331
    %v522 = vpop.f32.mrb[0].mxu0
    %v523 = vadd.f32 %v91, %v522
    %v524 = vpop.f32.mrb[0].mxu0
    %v525 = vadd.f32 %v95, %v524
    %v526 = vpop.f32.mrb[0].mxu0
    %v527 = vadd.f32 %v91, %v526
    %v528 = vpop.f32.mrb[0].mxu0
    %v529 = vadd.f32 %v95, %v528
    %530 = vmatprep.mubr.bf16.mxu0 0
    %531 = vmatmul.mubr.bf16.gmra.mrb[0].mxu0 %v334
    %v532 = vpop.f32.mrb[0].mxu0
    %v533 = vadd.f32 %v91, %v532
    %v534 = vpop.f32.mrb[0].mxu0
    %v535 = vadd.f32 %v95, %v534
    %v536 = vpop.f32.mrb[0].mxu0
    %v537 = vadd.f32 %v91, %v536
    %v538 = vpop.f32.mrb[0].mxu0
    %v539 = vadd.f32 %v95, %v538
    %540 = vmatprep.mubr.bf16.mxu0 0
    %541 = vmatmul.mubr.bf16.gmra.mrb[0].mxu0 %v337
    %v542 = vpop.f32.mrb[0].mxu0
    %v543 = vadd.f32 %v91, %v542
    %v544 = vpop.f32.mrb[0].mxu0
    %v545 = vadd.f32 %v95, %v544
    %v546 = vpop.f32.mrb[0].mxu0
    %v547 = vadd.f32 %v91, %v546
    %v548 = vpop.f32.mrb[0].mxu0
    %v549 = vadd.f32 %v95, %v548
    %550 = vmatprep.mubr.bf16.mxu0 0
    %551 = vmatmul.mubr.bf16.gmra.mrb[0].mxu0 %v340
    %v552 = vpop.f32.mrb[0].mxu0
    %v553 = vadd.f32 %v91, %v552
    %v554 = vpop.f32.mrb[0].mxu0
    %v555 = vadd.f32 %v95, %v554
    %v556 = vpop.f32.mrb[0].mxu0
    %v557 = vadd.f32 %v91, %v556
    %v558 = vpop.f32.mrb[0].mxu0
    %v559 = vadd.f32 %v95, %v558
    %560 = vmatprep.mubr.bf16.mxu0 0
    %561 = vmatmul.mubr.bf16.gmra.mrb[0].mxu0 %v343
    %v562 = vpop.f32.mrb[0].mxu0
    %v563 = vadd.f32 %v91, %v562
    %v564 = vpop.f32.mrb[0].mxu0
    %v565 = vadd.f32 %v95, %v564
    %v566 = vpop.f32.mrb[0].mxu0
    %v567 = vadd.f32 %v91, %v566
    %v568 = vpop.f32.mrb[0].mxu0
    %v569 = vadd.f32 %v95, %v568
    %570 = vdwg.mxu0
    %571 = vmatprep.subr.bf16.mxu0 %v261
    %572 = vmatpush1.bf16.msra.mxu0 %v260
    %573 = vmatprep.subr.bf16.mxu0 %v269
    %574 = vmatpush1.bf16.msra.mxu0 %v268
    %575 = vmatprep.subr.bf16.mxu0 %v277
    %576 = vmatpush1.bf16.msra.mxu0 %v276
    %577 = vmatprep.subr.bf16.mxu0 %v285
    %578 = vmatpush1.bf16.msra.mxu0 %v284
    %579 = vmatprep.subr.bf16.mxu0 0
    %580 = vmatpush1.bf16.msra.mxu0 0
    %581 = vmatprep.subr.bf16.mxu0 0
    %582 = vmatpush1.bf16.msra.mxu0 0
    %583 = vmatprep.subr.bf16.mxu0 0
    %584 = vmatpush1.bf16.msra.mxu0 0
    %585 = vmatprep.subr.bf16.mxu0 0
    %586 = vmatpush1.bf16.msra.mxu0 0
    %587 = vmatprep.subr.bf16.mxu0 0
    %588 = vmatpush1.bf16.msra.mxu0 0
    %589 = vmatprep.subr.bf16.mxu0 0
    %590 = vmatpush1.bf16.msra.mxu0 0
    %591 = vmatprep.subr.bf16.mxu0 0
    %592 = vmatpush1.bf16.msra.mxu0 0
    %593 = vmatprep.subr.bf16.mxu0 0
    %594 = vmatpush1.bf16.msra.mxu0 0
    %595 = vmatprep.subr.bf16.mxu0 0
    %596 = vmatpush1.bf16.msra.mxu0 0
    %597 = vmatprep.subr.bf16.mxu0 0
    %598 = vmatpush1.bf16.msra.mxu0 0
    %599 = vmatprep.subr.bf16.mxu0 0
    %600 = vmatpush1.bf16.msra.mxu0 0
    %601 = vmatprep.subr.bf16.mxu0 0
    %602 = vmatpush1.bf16.msra.mxu0 0
    %603 = vmatprep.mubr.bf16.mxu0 0
    %604 = vmatmul.mubr.bf16.gmra.mrb[0].mxu0 %v322
    %v605 = vpop.f32.mrb[0].mxu0
    %v606 = vadd.f32 %v99, %v605
    %v607 = vpop.f32.mrb[0].mxu0
    %v608 = vadd.f32 %v103, %v607
    %v609 = vpop.f32.mrb[0].mxu0
    %v610 = vadd.f32 %v99, %v609
    %v611 = vpop.f32.mrb[0].mxu0
    %v612 = vadd.f32 %v103, %v611
    %613 = vmatprep.mubr.bf16.mxu0 0
    %614 = vmatmul.mubr.bf16.gmra.mrb[0].mxu0 %v325
    %v615 = vpop.f32.mrb[0].mxu0
    %v616 = vadd.f32 %v99, %v615
    %v617 = vpop.f32.mrb[0].mxu0
    %v618 = vadd.f32 %v103, %v617
    %v619 = vpop.f32.mrb[0].mxu0
    %v620 = vadd.f32 %v99, %v619
    %v621 = vpop.f32.mrb[0].mxu0
    %v622 = vadd.f32 %v103, %v621
    %623 = vmatprep.mubr.bf16.mxu0 0
    %624 = vmatmul.mubr.bf16.gmra.mrb[0].mxu0 %v328
    %v625 = vpop.f32.mrb[0].mxu0
    %v626 = vadd.f32 %v99, %v625
    %v627 = vpop.f32.mrb[0].mxu0
    %v628 = vadd.f32 %v103, %v627
    %v629 = vpop.f32.mrb[0].mxu0
    %v630 = vadd.f32 %v99, %v629
    %v631 = vpop.f32.mrb[0].mxu0
    %v632 = vadd.f32 %v103, %v631
    %633 = vmatprep.mubr.bf16.mxu0 0
    %634 = vmatmul.mubr.bf16.gmra.mrb[0].mxu0 %v331
    %v635 = vpop.f32.mrb[0].mxu0
    %v636 = vadd.f32 %v99, %v635
    %v637 = vpop.f32.mrb[0].mxu0
    %v638 = vadd.f32 %v103, %v637
    %v639 = vpop.f32.mrb[0].mxu0
    %v640 = vadd.f32 %v99, %v639
    %v641 = vpop.f32.mrb[0].mxu0
    %v642 = vadd.f32 %v103, %v641
    %643 = vmatprep.mubr.bf16.mxu0 0
    %644 = vmatmul.mubr.bf16.gmra.mrb[0].mxu0 %v334
    %v645 = vpop.f32.mrb[0].mxu0
    %v646 = vadd.f32 %v99, %v645
    %v647 = vpop.f32.mrb[0].mxu0
    %v648 = vadd.f32 %v103, %v647
    %v649 = vpop.f32.mrb[0].mxu0
    %v650 = vadd.f32 %v99, %v649
    %v651 = vpop.f32.mrb[0].mxu0
    %v652 = vadd.f32 %v103, %v651
    %653 = vmatprep.mubr.bf16.mxu0 0
    %654 = vmatmul.mubr.bf16.gmra.mrb[0].mxu0 %v337
    %v655 = vpop.f32.mrb[0].mxu0
    %v656 = vadd.f32 %v99, %v655
    %v657 = vpop.f32.mrb[0].mxu0
    %v658 = vadd.f32 %v103, %v657
    %v659 = vpop.f32.mrb[0].mxu0
    %v660 = vadd.f32 %v99, %v659
    %v661 = vpop.f32.mrb[0].mxu0
    %v662 = vadd.f32 %v103, %v661
    %663 = vmatprep.mubr.bf16.mxu0 0
    %664 = vmatmul.mubr.bf16.gmra.mrb[0].mxu0 %v340
    %v665 = vpop.f32.mrb[0].mxu0
    %v666 = vadd.f32 %v99, %v665
    %v667 = vpop.f32.mrb[0].mxu0
    %v668 = vadd.f32 %v103, %v667
    %v669 = vpop.f32.mrb[0].mxu0
    %v670 = vadd.f32 %v99, %v669
    %v671 = vpop.f32.mrb[0].mxu0
    %v672 = vadd.f32 %v103, %v671
    %673 = vmatprep.mubr.bf16.mxu0 0
    %674 = vmatmul.mubr.bf16.gmra.mrb[0].mxu0 %v343
    %v675 = vpop.f32.mrb[0].mxu0
    %v676 = vadd.f32 %v99, %v675
    %v677 = vpop.f32.mrb[0].mxu0
    %v678 = vadd.f32 %v103, %v677
    %v679 = vpop.f32.mrb[0].mxu0
    %v680 = vadd.f32 %v99, %v679
    %v681 = vpop.f32.mrb[0].mxu0
    %v682 = vadd.f32 %v103, %v681
    %683 = vdwg.mxu0
    %684 = vmatprep.subr.bf16.mxu0 %v263
    %685 = vmatpush1.bf16.msra.mxu0 %v262
    %686 = vmatprep.subr.bf16.mxu0 %v271
    %687 = vmatpush1.bf16.msra.mxu0 %v270
    %688 = vmatprep.subr.bf16.mxu0 %v279
    %689 = vmatpush1.bf16.msra.mxu0 %v278
    %690 = vmatprep.subr.bf16.mxu0 %v287
    %691 = vmatpush1.bf16.msra.mxu0 %v286
    %692 = vmatprep.subr.bf16.mxu0 0
    %693 = vmatpush1.bf16.msra.mxu0 0
    %694 = vmatprep.subr.bf16.mxu0 0
    %695 = vmatpush1.bf16.msra.mxu0 0
    %696 = vmatprep.subr.bf16.mxu0 0
    %697 = vmatpush1.bf16.msra.mxu0 0
    %698 = vmatprep.subr.bf16.mxu0 0
    %699 = vmatpush1.bf16.msra.mxu0 0
    %700 = vmatprep.subr.bf16.mxu0 0
    %701 = vmatpush1.bf16.msra.mxu0 0
    %702 = vmatprep.subr.bf16.mxu0 0
    %703 = vmatpush1.bf16.msra.mxu0 0
    %704 = vmatprep.subr.bf16.mxu0 0
    %705 = vmatpush1.bf16.msra.mxu0 0
    %706 = vmatprep.subr.bf16.mxu0 0
    %707 = vmatpush1.bf16.msra.mxu0 0
    %708 = vmatprep.subr.bf16.mxu0 0
    %709 = vmatpush1.bf16.msra.mxu0 0
    %710 = vmatprep.subr.bf16.mxu0 0
    %711 = vmatpush1.bf16.msra.mxu0 0
    %712 = vmatprep.subr.bf16.mxu0 0
    %713 = vmatpush1.bf16.msra.mxu0 0
    %714 = vmatprep.subr.bf16.mxu0 0
    %715 = vmatpush1.bf16.msra.mxu0 0
    %716 = vmatprep.mubr.bf16.mxu0 0
    %717 = vmatmul.mubr.bf16.gmra.mrb[0].mxu0 %v322
    %v718 = vpop.f32.mrb[0].mxu0
    %v719 = vadd.f32 %v107, %v718
    %v720 = vpop.f32.mrb[0].mxu0
    %v721 = vadd.f32 %v111, %v720
    %v722 = vpop.f32.mrb[0].mxu0
    %v723 = vadd.f32 %v107, %v722
    %v724 = vpop.f32.mrb[0].mxu0
    %v725 = vadd.f32 %v111, %v724
    %726 = vmatprep.mubr.bf16.mxu0 0
    %727 = vmatmul.mubr.bf16.gmra.mrb[0].mxu0 %v325
    %v728 = vpop.f32.mrb[0].mxu0
    %v729 = vadd.f32 %v107, %v728
    %v730 = vpop.f32.mrb[0].mxu0
    %v731 = vadd.f32 %v111, %v730
    %v732 = vpop.f32.mrb[0].mxu0
    %v733 = vadd.f32 %v107, %v732
    %v734 = vpop.f32.mrb[0].mxu0
    %v735 = vadd.f32 %v111, %v734
    %736 = vmatprep.mubr.bf16.mxu0 0
    %737 = vmatmul.mubr.bf16.gmra.mrb[0].mxu0 %v328
    %v738 = vpop.f32.mrb[0].mxu0
    %v739 = vadd.f32 %v107, %v738
    %v740 = vpop.f32.mrb[0].mxu0
    %v741 = vadd.f32 %v111, %v740
    %v742 = vpop.f32.mrb[0].mxu0
    %v743 = vadd.f32 %v107, %v742
    %v744 = vpop.f32.mrb[0].mxu0
    %v745 = vadd.f32 %v111, %v744
    %746 = vmatprep.mubr.bf16.mxu0 0
    %747 = vmatmul.mubr.bf16.gmra.mrb[0].mxu0 %v331
    %v748 = vpop.f32.mrb[0].mxu0
    %v749 = vadd.f32 %v107, %v748
    %v750 = vpop.f32.mrb[0].mxu0
    %v751 = vadd.f32 %v111, %v750
    %v752 = vpop.f32.mrb[0].mxu0
    %v753 = vadd.f32 %v107, %v752
    %v754 = vpop.f32.mrb[0].mxu0
    %v755 = vadd.f32 %v111, %v754
    %756 = vmatprep.mubr.bf16.mxu0 0
    %757 = vmatmul.mubr.bf16.gmra.mrb[0].mxu0 %v334
    %v758 = vpop.f32.mrb[0].mxu0
    %v759 = vadd.f32 %v107, %v758
    %v760 = vpop.f32.mrb[0].mxu0
    %v761 = vadd.f32 %v111, %v760
    %v762 = vpop.f32.mrb[0].mxu0
    %v763 = vadd.f32 %v107, %v762
    %v764 = vpop.f32.mrb[0].mxu0
    %v765 = vadd.f32 %v111, %v764
    %766 = vmatprep.mubr.bf16.mxu0 0
    %767 = vmatmul.mubr.bf16.gmra.mrb[0].mxu0 %v337
    %v768 = vpop.f32.mrb[0].mxu0
    %v769 = vadd.f32 %v107, %v768
    %v770 = vpop.f32.mrb[0].mxu0
    %v771 = vadd.f32 %v111, %v770
    %v772 = vpop.f32.mrb[0].mxu0
    %v773 = vadd.f32 %v107, %v772
    %v774 = vpop.f32.mrb[0].mxu0
    %v775 = vadd.f32 %v111, %v774
    %776 = vmatprep.mubr.bf16.mxu0 0
    %777 = vmatmul.mubr.bf16.gmra.mrb[0].mxu0 %v340
    %v778 = vpop.f32.mrb[0].mxu0
    %v779 = vadd.f32 %v107, %v778
    %v780 = vpop.f32.mrb[0].mxu0
    %v781 = vadd.f32 %v111, %v780
    %v782 = vpop.f32.mrb[0].mxu0
    %v783 = vadd.f32 %v107, %v782
    %v784 = vpop.f32.mrb[0].mxu0
    %v785 = vadd.f32 %v111, %v784
    %786 = vmatprep.mubr.bf16.mxu0 0
    %787 = vmatmul.mubr.bf16.gmra.mrb[0].mxu0 %v343
    %v788 = vpop.f32.mrb[0].mxu0
    %v789 = vadd.f32 %v107, %v788
    %v790 = vpop.f32.mrb[0].mxu0
    %v791 = vadd.f32 %v111, %v790
    %v792 = vpop.f32.mrb[0].mxu0
    %v793 = vadd.f32 %v107, %v792
    %v794 = vpop.f32.mrb[0].mxu0
    %v795 = vadd.f32 %v111, %v794
    %796 = vdwg.mxu0
    %v797 = vmax.f32 %v380, %v382
    %v798 = vmax.f32 %v797, %v493
    %v799 = vmax.f32 %v798, %v495
    %v800 = vmax.f32 %v799, %v606
    %v801 = vmax.f32 %v800, %v608
    %v802 = vmax.f32 %v801, %v719
    %v803 = vmax.f32 %v802, %v721
    %804 = vmax.xlane.f32.xlu0 %v803
    %v805 = vpop.xlane.xlu0 %804
    %v806 = vmax.f32 %v384, %v386
    %v807 = vmax.f32 %v806, %v497
    %v808 = vmax.f32 %v807, %v499
    %v809 = vmax.f32 %v808, %v610
    %v810 = vmax.f32 %v809, %v612
    %v811 = vmax.f32 %v810, %v723
    %v812 = vmax.f32 %v811, %v725
    %813 = vmax.xlane.f32.xlu0 %v812
    %v814 = vpop.xlane.xlu0 %813
    %v815 = vmax.f32 %v390, %v392
    %v816 = vmax.f32 %v815, %v503
    %v817 = vmax.f32 %v816, %v505
    %v818 = vmax.f32 %v817, %v616
    %v819 = vmax.f32 %v818, %v618
    %v820 = vmax.f32 %v819, %v729
    %v821 = vmax.f32 %v820, %v731
    %822 = vmax.xlane.f32.xlu0 %v821
    %v823 = vpop.xlane.xlu0 %822
    %v824 = vmax.f32 %v394, %v396
    %v825 = vmax.f32 %v824, %v507
    %v826 = vmax.f32 %v825, %v509
    %v827 = vmax.f32 %v826, %v620
    %v828 = vmax.f32 %v827, %v622
    %v829 = vmax.f32 %v828, %v733
    %v830 = vmax.f32 %v829, %v735
    %831 = vmax.xlane.f32.xlu0 %v830
    %v832 = vpop.xlane.xlu0 %831
    %v833 = vmax.f32 %v400, %v402
    %v834 = vmax.f32 %v833, %v513
    %v835 = vmax.f32 %v834, %v515
    %v836 = vmax.f32 %v835, %v626
    %v837 = vmax.f32 %v836, %v628
    %v838 = vmax.f32 %v837, %v739
    %v839 = vmax.f32 %v838, %v741
    %840 = vmax.xlane.f32.xlu0 %v839
    %v841 = vpop.xlane.xlu0 %840
    %v842 = vmax.f32 %v404, %v406
    %v843 = vmax.f32 %v842, %v517
    %v844 = vmax.f32 %v843, %v519
    %v845 = vmax.f32 %v844, %v630
    %v846 = vmax.f32 %v845, %v632
    %v847 = vmax.f32 %v846, %v743
    %v848 = vmax.f32 %v847, %v745
    %849 = vmax.xlane.f32.xlu0 %v848
    %v850 = vpop.xlane.xlu0 %849
    %v851 = vmax.f32 %v410, %v412
    %v852 = vmax.f32 %v851, %v523
    %v853 = vmax.f32 %v852, %v525
    %v854 = vmax.f32 %v853, %v636
    %v855 = vmax.f32 %v854, %v638
    %v856 = vmax.f32 %v855, %v749
    %v857 = vmax.f32 %v856, %v751
    %858 = vmax.xlane.f32.xlu0 %v857
    %v859 = vpop.xlane.xlu0 %858
    %v860 = vmax.f32 %v414, %v416
    %v861 = vmax.f32 %v860, %v527
    %v862 = vmax.f32 %v861, %v529
    %v863 = vmax.f32 %v862, %v640
    %v864 = vmax.f32 %v863, %v642
    %v865 = vmax.f32 %v864, %v753
    %v866 = vmax.f32 %v865, %v755
    %867 = vmax.xlane.f32.xlu0 %v866
    %v868 = vpop.xlane.xlu0 %867
    %v869 = vmax.f32 %v420, %v422
    %v870 = vmax.f32 %v869, %v533
    %v871 = vmax.f32 %v870, %v535
    %v872 = vmax.f32 %v871, %v646
    %v873 = vmax.f32 %v872, %v648
    %v874 = vmax.f32 %v873, %v759
    %v875 = vmax.f32 %v874, %v761
    %876 = vmax.xlane.f32.xlu0 %v875
    %v877 = vpop.xlane.xlu0 %876
    %v878 = vmax.f32 %v424, %v426
    %v879 = vmax.f32 %v878, %v537
    %v880 = vmax.f32 %v879, %v539
    %v881 = vmax.f32 %v880, %v650
    %v882 = vmax.f32 %v881, %v652
    %v883 = vmax.f32 %v882, %v763
    %v884 = vmax.f32 %v883, %v765
    %885 = vmax.xlane.f32.xlu0 %v884
    %v886 = vpop.xlane.xlu0 %885
    %v887 = vmax.f32 %v430, %v432
    %v888 = vmax.f32 %v887, %v543
    %v889 = vmax.f32 %v888, %v545
    %v890 = vmax.f32 %v889, %v656
    %v891 = vmax.f32 %v890, %v658
    %v892 = vmax.f32 %v891, %v769
    %v893 = vmax.f32 %v892, %v771
    %894 = vmax.xlane.f32.xlu0 %v893
    %v895 = vpop.xlane.xlu0 %894
    %v896 = vmax.f32 %v434, %v436
    %v897 = vmax.f32 %v896, %v547
    %v898 = vmax.f32 %v897, %v549
    %v899 = vmax.f32 %v898, %v660
    %v900 = vmax.f32 %v899, %v662
    %v901 = vmax.f32 %v900, %v773
    %v902 = vmax.f32 %v901, %v775
    %903 = vmax.xlane.f32.xlu0 %v902
    %v904 = vpop.xlane.xlu0 %903
    %v905 = vmax.f32 %v440, %v442
    %v906 = vmax.f32 %v905, %v553
    %v907 = vmax.f32 %v906, %v555
    %v908 = vmax.f32 %v907, %v666
    %v909 = vmax.f32 %v908, %v668
    %v910 = vmax.f32 %v909, %v779
    %v911 = vmax.f32 %v910, %v781
    %912 = vmax.xlane.f32.xlu0 %v911
    %v913 = vpop.xlane.xlu0 %912
    %v914 = vmax.f32 %v444, %v446
    %v915 = vmax.f32 %v914, %v557
    %v916 = vmax.f32 %v915, %v559
    %v917 = vmax.f32 %v916, %v670
    %v918 = vmax.f32 %v917, %v672
    %v919 = vmax.f32 %v918, %v783
    %v920 = vmax.f32 %v919, %v785
    %921 = vmax.xlane.f32.xlu0 %v920
    %v922 = vpop.xlane.xlu0 %921
    %v923 = vmax.f32 %v450, %v452
    %v924 = vmax.f32 %v923, %v563
    %v925 = vmax.f32 %v924, %v565
    %v926 = vmax.f32 %v925, %v676
    %v927 = vmax.f32 %v926, %v678
    %v928 = vmax.f32 %v927, %v789
    %v929 = vmax.f32 %v928, %v791
    %930 = vmax.xlane.f32.xlu0 %v929
    %v931 = vpop.xlane.xlu0 %930
    %v932 = vmax.f32 %v454, %v456
    %v933 = vmax.f32 %v932, %v567
    %v934 = vmax.f32 %v933, %v569
    %v935 = vmax.f32 %v934, %v680
    %v936 = vmax.f32 %v935, %v682
    %v937 = vmax.f32 %v936, %v793
    %v938 = vmax.f32 %v937, %v795
    %939 = vmax.xlane.f32.xlu0 %v938
    %v940 = vpop.xlane.xlu0 %939
    %v941 = vsub.f32 %v380, %v805
    %v942 = vsub.f32 %v382, %v805
    %v943 = vsub.f32 %v493, %v805
    %v944 = vsub.f32 %v495, %v805
    %v945 = vsub.f32 %v606, %v805
    %v946 = vsub.f32 %v608, %v805
    %v947 = vsub.f32 %v719, %v805
    %v948 = vsub.f32 %v721, %v805
    %v949 = vsub.f32 %v384, %v814
    %v950 = vsub.f32 %v386, %v814
    %v951 = vsub.f32 %v497, %v814
    %v952 = vsub.f32 %v499, %v814
    %v953 = vsub.f32 %v610, %v814
    %v954 = vsub.f32 %v612, %v814
    %v955 = vsub.f32 %v723, %v814
    %v956 = vsub.f32 %v725, %v814
    %v957 = vsub.f32 %v390, %v823
    %v958 = vsub.f32 %v392, %v823
    %v959 = vsub.f32 %v503, %v823
    %v960 = vsub.f32 %v505, %v823
    %v961 = vsub.f32 %v616, %v823
    %v962 = vsub.f32 %v618, %v823
    %v963 = vsub.f32 %v729, %v823
    %v964 = vsub.f32 %v731, %v823
    %v965 = vsub.f32 %v394, %v832
    %v966 = vsub.f32 %v396, %v832
    %v967 = vsub.f32 %v507, %v832
    %v968 = vsub.f32 %v509, %v832
    %v969 = vsub.f32 %v620, %v832
    %v970 = vsub.f32 %v622, %v832
    %v971 = vsub.f32 %v733, %v832
    %v972 = vsub.f32 %v735, %v832
    %v973 = vsub.f32 %v400, %v841
    %v974 = vsub.f32 %v402, %v841
    %v975 = vsub.f32 %v513, %v841
    %v976 = vsub.f32 %v515, %v841
    %v977 = vsub.f32 %v626, %v841
    %v978 = vsub.f32 %v628, %v841
    %v979 = vsub.f32 %v739, %v841
    %v980 = vsub.f32 %v741, %v841
    %v981 = vsub.f32 %v404, %v850
    %v982 = vsub.f32 %v406, %v850
    %v983 = vsub.f32 %v517, %v850
    %v984 = vsub.f32 %v519, %v850
    %v985 = vsub.f32 %v630, %v850
    %v986 = vsub.f32 %v632, %v850
    %v987 = vsub.f32 %v743, %v850
    %v988 = vsub.f32 %v745, %v850
    %v989 = vsub.f32 %v410, %v859
    %v990 = vsub.f32 %v412, %v859
    %v991 = vsub.f32 %v523, %v859
    %v992 = vsub.f32 %v525, %v859
    %v993 = vsub.f32 %v636, %v859
    %v994 = vsub.f32 %v638, %v859
    %v995 = vsub.f32 %v749, %v859
    %v996 = vsub.f32 %v751, %v859
    %v997 = vsub.f32 %v414, %v868
    %v998 = vsub.f32 %v416, %v868
    %v999 = vsub.f32 %v527, %v868
    %v1000 = vsub.f32 %v529, %v868
    %v1001 = vsub.f32 %v640, %v868
    %v1002 = vsub.f32 %v642, %v868
    %v1003 = vsub.f32 %v753, %v868
    %v1004 = vsub.f32 %v755, %v868
    %v1005 = vsub.f32 %v420, %v877
    %v1006 = vsub.f32 %v422, %v877
    %v1007 = vsub.f32 %v533, %v877
    %v1008 = vsub.f32 %v535, %v877
    %v1009 = vsub.f32 %v646, %v877
    %v1010 = vsub.f32 %v648, %v877
    %v1011 = vsub.f32 %v759, %v877
    %v1012 = vsub.f32 %v761, %v877
    %v1013 = vsub.f32 %v424, %v886
    %v1014 = vsub.f32 %v426, %v886
    %v1015 = vsub.f32 %v537, %v886
    %v1016 = vsub.f32 %v539, %v886
    %v1017 = vsub.f32 %v650, %v886
    %v1018 = vsub.f32 %v652, %v886
    %v1019 = vsub.f32 %v763, %v886
    %v1020 = vsub.f32 %v765, %v886
    %v1021 = vsub.f32 %v430, %v895
    %v1022 = vsub.f32 %v432, %v895
    %v1023 = vsub.f32 %v543, %v895
    %v1024 = vsub.f32 %v545, %v895
    %v1025 = vsub.f32 %v656, %v895
    %v1026 = vsub.f32 %v658, %v895
    %v1027 = vsub.f32 %v769, %v895
    %v1028 = vsub.f32 %v771, %v895
    %v1029 = vsub.f32 %v434, %v904
    %v1030 = vsub.f32 %v436, %v904
    %v1031 = vsub.f32 %v547, %v904
    %v1032 = vsub.f32 %v549, %v904
    %v1033 = vsub.f32 %v660, %v904
    %v1034 = vsub.f32 %v662, %v904
    %v1035 = vsub.f32 %v773, %v904
    %v1036 = vsub.f32 %v775, %v904
    %v1037 = vsub.f32 %v440, %v913
    %v1038 = vsub.f32 %v442, %v913
    %v1039 = vsub.f32 %v553, %v913
    %v1040 = vsub.f32 %v555, %v913
    %v1041 = vsub.f32 %v666, %v913
    %v1042 = vsub.f32 %v668, %v913
    %v1043 = vsub.f32 %v779, %v913
    %v1044 = vsub.f32 %v781, %v913
    %v1045 = vsub.f32 %v444, %v922
    %v1046 = vsub.f32 %v446, %v922
    %v1047 = vsub.f32 %v557, %v922
    %v1048 = vsub.f32 %v559, %v922
    %v1049 = vsub.f32 %v670, %v922
    %v1050 = vsub.f32 %v672, %v922
    %v1051 = vsub.f32 %v783, %v922
    %v1052 = vsub.f32 %v785, %v922
    %v1053 = vsub.f32 %v450, %v931
    %v1054 = vsub.f32 %v452, %v931
    %v1055 = vsub.f32 %v563, %v931
    %v1056 = vsub.f32 %v565, %v931
    %v1057 = vsub.f32 %v676, %v931
    %v1058 = vsub.f32 %v678, %v931
    %v1059 = vsub.f32 %v789, %v931
    %v1060 = vsub.f32 %v791, %v931
    %v1061 = vsub.f32 %v454, %v940
    %v1062 = vsub.f32 %v456, %v940
    %v1063 = vsub.f32 %v567, %v940
    %v1064 = vsub.f32 %v569, %v940
    %v1065 = vsub.f32 %v680, %v940
    %v1066 = vsub.f32 %v682, %v940
    %v1067 = vsub.f32 %v793, %v940
    %v1068 = vsub.f32 %v795, %v940
    %v1069 = vmul.f32 %v941, 1.442695
    %v1070 = vpow.pop %v1069
    %v1071 = vmul.f32 %v942, 1.442695
    %v1072 = vpow.pop %v1071
    %v1073 = vmul.f32 %v943, 1.442695
    %v1074 = vpow.pop %v1073
    %v1075 = vmul.f32 %v944, 1.442695
    %v1076 = vpow.pop %v1075
    %v1077 = vmul.f32 %v945, 1.442695
    %v1078 = vpow.pop %v1077
    %v1079 = vmul.f32 %v946, 1.442695
    %v1080 = vpow.pop %v1079
    %v1081 = vmul.f32 %v947, 1.442695
    %v1082 = vpow.pop %v1081
    %v1083 = vmul.f32 %v948, 1.442695
    %v1084 = vpow.pop %v1083
    %v1085 = vmul.f32 %v949, 1.442695
    %v1086 = vpow.pop %v1085
    %v1087 = vmul.f32 %v950, 1.442695
    %v1088 = vpow.pop %v1087
    %v1089 = vmul.f32 %v951, 1.442695
    %v1090 = vpow.pop %v1089
    %v1091 = vmul.f32 %v952, 1.442695
    %v1092 = vpow.pop %v1091
    %v1093 = vmul.f32 %v953, 1.442695
    %v1094 = vpow.pop %v1093
    %v1095 = vmul.f32 %v954, 1.442695
    %v1096 = vpow.pop %v1095
    %v1097 = vmul.f32 %v955, 1.442695
    %v1098 = vpow.pop %v1097
    %v1099 = vmul.f32 %v956, 1.442695
    %v1100 = vpow.pop %v1099
    %v1101 = vmul.f32 %v957, 1.442695
    %v1102 = vpow.pop %v1101
    %v1103 = vmul.f32 %v958, 1.442695
    %v1104 = vpow.pop %v1103
    %v1105 = vmul.f32 %v959, 1.442695
    %v1106 = vpow.pop %v1105
    %v1107 = vmul.f32 %v960, 1.442695
    %v1108 = vpow.pop %v1107
    %v1109 = vmul.f32 %v961, 1.442695
    %v1110 = vpow.pop %v1109
    %v1111 = vmul.f32 %v962, 1.442695
    %v1112 = vpow.pop %v1111
    %v1113 = vmul.f32 %v963, 1.442695
    %v1114 = vpow.pop %v1113
    %v1115 = vmul.f32 %v964, 1.442695
    %v1116 = vpow.pop %v1115
    %v1117 = vmul.f32 %v965, 1.442695
    %v1118 = vpow.pop %v1117
    %v1119 = vmul.f32 %v966, 1.442695
    %v1120 = vpow.pop %v1119
    %v1121 = vmul.f32 %v967, 1.442695
    %v1122 = vpow.pop %v1121
    %v1123 = vmul.f32 %v968, 1.442695
    %v1124 = vpow.pop %v1123
    %v1125 = vmul.f32 %v969, 1.442695
    %v1126 = vpow.pop %v1125
    %v1127 = vmul.f32 %v970, 1.442695
    %v1128 = vpow.pop %v1127
    %v1129 = vmul.f32 %v971, 1.442695
    %v1130 = vpow.pop %v1129
    %v1131 = vmul.f32 %v972, 1.442695
    %v1132 = vpow.pop %v1131
    %v1133 = vmul.f32 %v973, 1.442695
    %v1134 = vpow.pop %v1133
    %v1135 = vmul.f32 %v974, 1.442695
    %v1136 = vpow.pop %v1135
    %v1137 = vmul.f32 %v975, 1.442695
    %v1138 = vpow.pop %v1137
    %v1139 = vmul.f32 %v976, 1.442695
    %v1140 = vpow.pop %v1139
    %v1141 = vmul.f32 %v977, 1.442695
    %v1142 = vpow.pop %v1141
    %v1143 = vmul.f32 %v978, 1.442695
    %v1144 = vpow.pop %v1143
    %v1145 = vmul.f32 %v979, 1.442695
    %v1146 = vpow.pop %v1145
    %v1147 = vmul.f32 %v980, 1.442695
    %v1148 = vpow.pop %v1147
    %v1149 = vmul.f32 %v981, 1.442695
    %v1150 = vpow.pop %v1149
    %v1151 = vmul.f32 %v982, 1.442695
    %v1152 = vpow.pop %v1151
    %v1153 = vmul.f32 %v983, 1.442695
    %v1154 = vpow.pop %v1153
    %v1155 = vmul.f32 %v984, 1.442695
    %v1156 = vpow.pop %v1155
    %v1157 = vmul.f32 %v985, 1.442695
    %v1158 = vpow.pop %v1157
    %v1159 = vmul.f32 %v986, 1.442695
    %v1160 = vpow.pop %v1159
    %v1161 = vmul.f32 %v987, 1.442695
    %v1162 = vpow.pop %v1161
    %v1163 = vmul.f32 %v988, 1.442695
    %v1164 = vpow.pop %v1163
    %v1165 = vmul.f32 %v989, 1.442695
    %v1166 = vpow.pop %v1165
    %v1167 = vmul.f32 %v990, 1.442695
    %v1168 = vpow.pop %v1167
    %v1169 = vmul.f32 %v991, 1.442695
    %v1170 = vpow.pop %v1169
    %v1171 = vmul.f32 %v992, 1.442695
    %v1172 = vpow.pop %v1171
    %v1173 = vmul.f32 %v993, 1.442695
    %v1174 = vpow.pop %v1173
    %v1175 = vmul.f32 %v994, 1.442695
    %v1176 = vpow.pop %v1175
    %v1177 = vmul.f32 %v995, 1.442695
    %v1178 = vpow.pop %v1177
    %v1179 = vmul.f32 %v996, 1.442695
    %v1180 = vpow.pop %v1179
    %v1181 = vmul.f32 %v997, 1.442695
    %v1182 = vpow.pop %v1181
    %v1183 = vmul.f32 %v998, 1.442695
    %v1184 = vpow.pop %v1183
    %v1185 = vmul.f32 %v999, 1.442695
    %v1186 = vpow.pop %v1185
    %v1187 = vmul.f32 %v1000, 1.442695
    %v1188 = vpow.pop %v1187
    %v1189 = vmul.f32 %v1001, 1.442695
    %v1190 = vpow.pop %v1189
    %v1191 = vmul.f32 %v1002, 1.442695
    %v1192 = vpow.pop %v1191
    %v1193 = vmul.f32 %v1003, 1.442695
    %v1194 = vpow.pop %v1193
    %v1195 = vmul.f32 %v1004, 1.442695
    %v1196 = vpow.pop %v1195
    %v1197 = vmul.f32 %v1005, 1.442695
    %v1198 = vpow.pop %v1197
    %v1199 = vmul.f32 %v1006, 1.442695
    %v1200 = vpow.pop %v1199
    %v1201 = vmul.f32 %v1007, 1.442695
    %v1202 = vpow.pop %v1201
    %v1203 = vmul.f32 %v1008, 1.442695
    %v1204 = vpow.pop %v1203
    %v1205 = vmul.f32 %v1009, 1.442695
    %v1206 = vpow.pop %v1205
    %v1207 = vmul.f32 %v1010, 1.442695
    %v1208 = vpow.pop %v1207
    %v1209 = vmul.f32 %v1011, 1.442695
    %v1210 = vpow.pop %v1209
    %v1211 = vmul.f32 %v1012, 1.442695
    %v1212 = vpow.pop %v1211
    %v1213 = vmul.f32 %v1013, 1.442695
    %v1214 = vpow.pop %v1213
    %v1215 = vmul.f32 %v1014, 1.442695
    %v1216 = vpow.pop %v1215
    %v1217 = vmul.f32 %v1015, 1.442695
    %v1218 = vpow.pop %v1217
    %v1219 = vmul.f32 %v1016, 1.442695
    %v1220 = vpow.pop %v1219
    %v1221 = vmul.f32 %v1017, 1.442695
    %v1222 = vpow.pop %v1221
    %v1223 = vmul.f32 %v1018, 1.442695
    %v1224 = vpow.pop %v1223
    %v1225 = vmul.f32 %v1019, 1.442695
    %v1226 = vpow.pop %v1225
    %v1227 = vmul.f32 %v1020, 1.442695
    %v1228 = vpow.pop %v1227
    %v1229 = vmul.f32 %v1021, 1.442695
    %v1230 = vpow.pop %v1229
    %v1231 = vmul.f32 %v1022, 1.442695
    %v1232 = vpow.pop %v1231
    %v1233 = vmul.f32 %v1023, 1.442695
    %v1234 = vpow.pop %v1233
    %v1235 = vmul.f32 %v1024, 1.442695
    %v1236 = vpow.pop %v1235
    %v1237 = vmul.f32 %v1025, 1.442695
    %v1238 = vpow.pop %v1237
    %v1239 = vmul.f32 %v1026, 1.442695
    %v1240 = vpow.pop %v1239
    %v1241 = vmul.f32 %v1027, 1.442695
    %v1242 = vpow.pop %v1241
    %v1243 = vmul.f32 %v1028, 1.442695
    %v1244 = vpow.pop %v1243
    %v1245 = vmul.f32 %v1029, 1.442695
    %v1246 = vpow.pop %v1245
    %v1247 = vmul.f32 %v1030, 1.442695
    %v1248 = vpow.pop %v1247
    %v1249 = vmul.f32 %v1031, 1.442695
    %v1250 = vpow.pop %v1249
    %v1251 = vmul.f32 %v1032, 1.442695
    %v1252 = vpow.pop %v1251
    %v1253 = vmul.f32 %v1033, 1.442695
    %v1254 = vpow.pop %v1253
    %v1255 = vmul.f32 %v1034, 1.442695
    %v1256 = vpow.pop %v1255
    %v1257 = vmul.f32 %v1035, 1.442695
    %v1258 = vpow.pop %v1257
    %v1259 = vmul.f32 %v1036, 1.442695
    %v1260 = vpow.pop %v1259
    %v1261 = vmul.f32 %v1037, 1.442695
    %v1262 = vpow.pop %v1261
    %v1263 = vmul.f32 %v1038, 1.442695
    %v1264 = vpow.pop %v1263
    %v1265 = vmul.f32 %v1039, 1.442695
    %v1266 = vpow.pop %v1265
    %v1267 = vmul.f32 %v1040, 1.442695
    %v1268 = vpow.pop %v1267
    %v1269 = vmul.f32 %v1041, 1.442695
    %v1270 = vpow.pop %v1269
    %v1271 = vmul.f32 %v1042, 1.442695
    %v1272 = vpow.pop %v1271
    %v1273 = vmul.f32 %v1043, 1.442695
    %v1274 = vpow.pop %v1273
    %v1275 = vmul.f32 %v1044, 1.442695
    %v1276 = vpow.pop %v1275
    %v1277 = vmul.f32 %v1045, 1.442695
    %v1278 = vpow.pop %v1277
    %v1279 = vmul.f32 %v1046, 1.442695
    %v1280 = vpow.pop %v1279
    %v1281 = vmul.f32 %v1047, 1.442695
    %v1282 = vpow.pop %v1281
    %v1283 = vmul.f32 %v1048, 1.442695
    %v1284 = vpow.pop %v1283
    %v1285 = vmul.f32 %v1049, 1.442695
    %v1286 = vpow.pop %v1285
    %v1287 = vmul.f32 %v1050, 1.442695
    %v1288 = vpow.pop %v1287
    %v1289 = vmul.f32 %v1051, 1.442695
    %v1290 = vpow.pop %v1289
    %v1291 = vmul.f32 %v1052, 1.442695
    %v1292 = vpow.pop %v1291
    %v1293 = vmul.f32 %v1053, 1.442695
    %v1294 = vpow.pop %v1293
    %v1295 = vmul.f32 %v1054, 1.442695
    %v1296 = vpow.pop %v1295
    %v1297 = vmul.f32 %v1055, 1.442695
    %v1298 = vpow.pop %v1297
    %v1299 = vmul.f32 %v1056, 1.442695
    %v1300 = vpow.pop %v1299
    %v1301 = vmul.f32 %v1057, 1.442695
    %v1302 = vpow.pop %v1301
    %v1303 = vmul.f32 %v1058, 1.442695
    %v1304 = vpow.pop %v1303
    %v1305 = vmul.f32 %v1059, 1.442695
    %v1306 = vpow.pop %v1305
    %v1307 = vmul.f32 %v1060, 1.442695
    %v1308 = vpow.pop %v1307
    %v1309 = vmul.f32 %v1061, 1.442695
    %v1310 = vpow.pop %v1309
    %v1311 = vmul.f32 %v1062, 1.442695
    %v1312 = vpow.pop %v1311
    %v1313 = vmul.f32 %v1063, 1.442695
    %v1314 = vpow.pop %v1313
    %v1315 = vmul.f32 %v1064, 1.442695
    %v1316 = vpow.pop %v1315
    %v1317 = vmul.f32 %v1065, 1.442695
    %v1318 = vpow.pop %v1317
    %v1319 = vmul.f32 %v1066, 1.442695
    %v1320 = vpow.pop %v1319
    %v1321 = vmul.f32 %v1067, 1.442695
    %v1322 = vpow.pop %v1321
    %v1323 = vmul.f32 %v1068, 1.442695
    %v1324 = vpow.pop %v1323
    %v1325 = vadd.f32 %v1070, %v1072
    %v1326 = vadd.f32 %v1325, %v1074
    %v1327 = vadd.f32 %v1326, %v1076
    %v1328 = vadd.f32 %v1327, %v1078
    %v1329 = vadd.f32 %v1328, %v1080
    %v1330 = vadd.f32 %v1329, %v1082
    %v1331 = vadd.f32 %v1330, %v1084
    %1332 = vadd.xlane.f32.xlu0 %v1331
    %v1333 = vpop.xlane.xlu0 %1332
    %v1334 = vadd.f32 %v1086, %v1088
    %v1335 = vadd.f32 %v1334, %v1090
    %v1336 = vadd.f32 %v1335, %v1092
    %v1337 = vadd.f32 %v1336, %v1094
    %v1338 = vadd.f32 %v1337, %v1096
    %v1339 = vadd.f32 %v1338, %v1098
    %v1340 = vadd.f32 %v1339, %v1100
    %1341 = vadd.xlane.f32.xlu0 %v1340
    %v1342 = vpop.xlane.xlu0 %1341
    %v1343 = vadd.f32 %v1102, %v1104
    %v1344 = vadd.f32 %v1343, %v1106
    %v1345 = vadd.f32 %v1344, %v1108
    %v1346 = vadd.f32 %v1345, %v1110
    %v1347 = vadd.f32 %v1346, %v1112
    %v1348 = vadd.f32 %v1347, %v1114
    %v1349 = vadd.f32 %v1348, %v1116
    %1350 = vadd.xlane.f32.xlu0 %v1349
    %v1351 = vpop.xlane.xlu0 %1350
    %v1352 = vadd.f32 %v1118, %v1120
    %v1353 = vadd.f32 %v1352, %v1122
    %v1354 = vadd.f32 %v1353, %v1124
    %v1355 = vadd.f32 %v1354, %v1126
    %v1356 = vadd.f32 %v1355, %v1128
    %v1357 = vadd.f32 %v1356, %v1130
    %v1358 = vadd.f32 %v1357, %v1132
    %1359 = vadd.xlane.f32.xlu0 %v1358
    %v1360 = vpop.xlane.xlu0 %1359
    %v1361 = vadd.f32 %v1134, %v1136
    %v1362 = vadd.f32 %v1361, %v1138
    %v1363 = vadd.f32 %v1362, %v1140
    %v1364 = vadd.f32 %v1363, %v1142
    %v1365 = vadd.f32 %v1364, %v1144
    %v1366 = vadd.f32 %v1365, %v1146
    %v1367 = vadd.f32 %v1366, %v1148
    %1368 = vadd.xlane.f32.xlu0 %v1367
    %v1369 = vpop.xlane.xlu0 %1368
    %v1370 = vadd.f32 %v1150, %v1152
    %v1371 = vadd.f32 %v1370, %v1154
    %v1372 = vadd.f32 %v1371, %v1156
    %v1373 = vadd.f32 %v1372, %v1158
    %v1374 = vadd.f32 %v1373, %v1160
    %v1375 = vadd.f32 %v1374, %v1162
    %v1376 = vadd.f32 %v1375, %v1164
    %1377 = vadd.xlane.f32.xlu0 %v1376
    %v1378 = vpop.xlane.xlu0 %1377
    %v1379 = vadd.f32 %v1166, %v1168
    %v1380 = vadd.f32 %v1379, %v1170
    %v1381 = vadd.f32 %v1380, %v1172
    %v1382 = vadd.f32 %v1381, %v1174
    %v1383 = vadd.f32 %v1382, %v1176
    %v1384 = vadd.f32 %v1383, %v1178
    %v1385 = vadd.f32 %v1384, %v1180
    %1386 = vadd.xlane.f32.xlu0 %v1385
    %v1387 = vpop.xlane.xlu0 %1386
    %v1388 = vadd.f32 %v1182, %v1184
    %v1389 = vadd.f32 %v1388, %v1186
    %v1390 = vadd.f32 %v1389, %v1188
    %v1391 = vadd.f32 %v1390, %v1190
    %v1392 = vadd.f32 %v1391, %v1192
    %v1393 = vadd.f32 %v1392, %v1194
    %v1394 = vadd.f32 %v1393, %v1196
    %1395 = vadd.xlane.f32.xlu0 %v1394
    %v1396 = vpop.xlane.xlu0 %1395
    %v1397 = vadd.f32 %v1198, %v1200
    %v1398 = vadd.f32 %v1397, %v1202
    %v1399 = vadd.f32 %v1398, %v1204
    %v1400 = vadd.f32 %v1399, %v1206
    %v1401 = vadd.f32 %v1400, %v1208
    %v1402 = vadd.f32 %v1401, %v1210
    %v1403 = vadd.f32 %v1402, %v1212
    %1404 = vadd.xlane.f32.xlu0 %v1403
    %v1405 = vpop.xlane.xlu0 %1404
    %v1406 = vadd.f32 %v1214, %v1216
    %v1407 = vadd.f32 %v1406, %v1218
    %v1408 = vadd.f32 %v1407, %v1220
    %v1409 = vadd.f32 %v1408, %v1222
    %v1410 = vadd.f32 %v1409, %v1224
    %v1411 = vadd.f32 %v1410, %v1226
    %v1412 = vadd.f32 %v1411, %v1228
    %1413 = vadd.xlane.f32.xlu0 %v1412
    %v1414 = vpop.xlane.xlu0 %1413
    %v1415 = vadd.f32 %v1230, %v1232
    %v1416 = vadd.f32 %v1415, %v1234
    %v1417 = vadd.f32 %v1416, %v1236
    %v1418 = vadd.f32 %v1417, %v1238
    %v1419 = vadd.f32 %v1418, %v1240
    %v1420 = vadd.f32 %v1419, %v1242
    %v1421 = vadd.f32 %v1420, %v1244
    %1422 = vadd.xlane.f32.xlu0 %v1421
    %v1423 = vpop.xlane.xlu0 %1422
    %v1424 = vadd.f32 %v1246, %v1248
    %v1425 = vadd.f32 %v1424, %v1250
    %v1426 = vadd.f32 %v1425, %v1252
    %v1427 = vadd.f32 %v1426, %v1254
    %v1428 = vadd.f32 %v1427, %v1256
    %v1429 = vadd.f32 %v1428, %v1258
    %v1430 = vadd.f32 %v1429, %v1260
    %1431 = vadd.xlane.f32.xlu0 %v1430
    %v1432 = vpop.xlane.xlu0 %1431
    %v1433 = vadd.f32 %v1262, %v1264
    %v1434 = vadd.f32 %v1433, %v1266
    %v1435 = vadd.f32 %v1434, %v1268
    %v1436 = vadd.f32 %v1435, %v1270
    %v1437 = vadd.f32 %v1436, %v1272
    %v1438 = vadd.f32 %v1437, %v1274
    %v1439 = vadd.f32 %v1438, %v1276
    %1440 = vadd.xlane.f32.xlu0 %v1439
    %v1441 = vpop.xlane.xlu0 %1440
    %v1442 = vadd.f32 %v1278, %v1280
    %v1443 = vadd.f32 %v1442, %v1282
    %v1444 = vadd.f32 %v1443, %v1284
    %v1445 = vadd.f32 %v1444, %v1286
    %v1446 = vadd.f32 %v1445, %v1288
    %v1447 = vadd.f32 %v1446, %v1290
    %v1448 = vadd.f32 %v1447, %v1292
    %1449 = vadd.xlane.f32.xlu0 %v1448
    %v1450 = vpop.xlane.xlu0 %1449
    %v1451 = vadd.f32 %v1294, %v1296
    %v1452 = vadd.f32 %v1451, %v1298
    %v1453 = vadd.f32 %v1452, %v1300
    %v1454 = vadd.f32 %v1453, %v1302
    %v1455 = vadd.f32 %v1454, %v1304
    %v1456 = vadd.f32 %v1455, %v1306
    %v1457 = vadd.f32 %v1456, %v1308
    %1458 = vadd.xlane.f32.xlu0 %v1457
    %v1459 = vpop.xlane.xlu0 %1458
    %v1460 = vadd.f32 %v1310, %v1312
    %v1461 = vadd.f32 %v1460, %v1314
    %v1462 = vadd.f32 %v1461, %v1316
    %v1463 = vadd.f32 %v1462, %v1318
    %v1464 = vadd.f32 %v1463, %v1320
    %v1465 = vadd.f32 %v1464, %v1322
    %v1466 = vadd.f32 %v1465, %v1324
    %1467 = vadd.xlane.f32.xlu0 %v1466
    %v1468 = vpop.xlane.xlu0 %1467
    %v1469 = vlog2.pop %v1333
    %v1470 = vmul.f32 %v1469, 0.6931472
    %v1471 = vlog2.pop %v1342
    %v1472 = vmul.f32 %v1471, 0.6931472
    %v1473 = vlog2.pop %v1351
    %v1474 = vmul.f32 %v1473, 0.6931472
    %v1475 = vlog2.pop %v1360
    %v1476 = vmul.f32 %v1475, 0.6931472
    %v1477 = vlog2.pop %v1369
    %v1478 = vmul.f32 %v1477, 0.6931472
    %v1479 = vlog2.pop %v1378
    %v1480 = vmul.f32 %v1479, 0.6931472
    %v1481 = vlog2.pop %v1387
    %v1482 = vmul.f32 %v1481, 0.6931472
    %v1483 = vlog2.pop %v1396
    %v1484 = vmul.f32 %v1483, 0.6931472
    %v1485 = vlog2.pop %v1405
    %v1486 = vmul.f32 %v1485, 0.6931472
    %v1487 = vlog2.pop %v1414
    %v1488 = vmul.f32 %v1487, 0.6931472
    %v1489 = vlog2.pop %v1423
    %v1490 = vmul.f32 %v1489, 0.6931472
    %v1491 = vlog2.pop %v1432
    %v1492 = vmul.f32 %v1491, 0.6931472
    %v1493 = vlog2.pop %v1441
    %v1494 = vmul.f32 %v1493, 0.6931472
    %v1495 = vlog2.pop %v1450
    %v1496 = vmul.f32 %v1495, 0.6931472
    %v1497 = vlog2.pop %v1459
    %v1498 = vmul.f32 %v1497, 0.6931472
    %v1499 = vlog2.pop %v1468
    %v1500 = vmul.f32 %v1499, 0.6931472
    %v1501 = vsub.f32 %v941, %v1470
    %v1502 = vsub.f32 %v942, %v1470
    %v1503 = vsub.f32 %v943, %v1470
    %v1504 = vsub.f32 %v944, %v1470
    %v1505 = vsub.f32 %v945, %v1470
    %v1506 = vsub.f32 %v946, %v1470
    %v1507 = vsub.f32 %v947, %v1470
    %v1508 = vsub.f32 %v948, %v1470
    %v1509 = vsub.f32 %v949, %v1472
    %v1510 = vsub.f32 %v950, %v1472
    %v1511 = vsub.f32 %v951, %v1472
    %v1512 = vsub.f32 %v952, %v1472
    %v1513 = vsub.f32 %v953, %v1472
    %v1514 = vsub.f32 %v954, %v1472
    %v1515 = vsub.f32 %v955, %v1472
    %v1516 = vsub.f32 %v956, %v1472
    %v1517 = vsub.f32 %v957, %v1474
    %v1518 = vsub.f32 %v958, %v1474
    %v1519 = vsub.f32 %v959, %v1474
    %v1520 = vsub.f32 %v960, %v1474
    %v1521 = vsub.f32 %v961, %v1474
    %v1522 = vsub.f32 %v962, %v1474
    %v1523 = vsub.f32 %v963, %v1474
    %v1524 = vsub.f32 %v964, %v1474
    %v1525 = vsub.f32 %v965, %v1476
    %v1526 = vsub.f32 %v966, %v1476
    %v1527 = vsub.f32 %v967, %v1476
    %v1528 = vsub.f32 %v968, %v1476
    %v1529 = vsub.f32 %v969, %v1476
    %v1530 = vsub.f32 %v970, %v1476
    %v1531 = vsub.f32 %v971, %v1476
    %v1532 = vsub.f32 %v972, %v1476
    %v1533 = vsub.f32 %v973, %v1478
    %v1534 = vsub.f32 %v974, %v1478
    %v1535 = vsub.f32 %v975, %v1478
    %v1536 = vsub.f32 %v976, %v1478
    %v1537 = vsub.f32 %v977, %v1478
    %v1538 = vsub.f32 %v978, %v1478
    %v1539 = vsub.f32 %v979, %v1478
    %v1540 = vsub.f32 %v980, %v1478
    %v1541 = vsub.f32 %v981, %v1480
    %v1542 = vsub.f32 %v982, %v1480
    %v1543 = vsub.f32 %v983, %v1480
    %v1544 = vsub.f32 %v984, %v1480
    %v1545 = vsub.f32 %v985, %v1480
    %v1546 = vsub.f32 %v986, %v1480
    %v1547 = vsub.f32 %v987, %v1480
    %v1548 = vsub.f32 %v988, %v1480
    %v1549 = vsub.f32 %v989, %v1482
    %v1550 = vsub.f32 %v990, %v1482
    %v1551 = vsub.f32 %v991, %v1482
    %v1552 = vsub.f32 %v992, %v1482
    %v1553 = vsub.f32 %v993, %v1482
    %v1554 = vsub.f32 %v994, %v1482
    %v1555 = vsub.f32 %v995, %v1482
    %v1556 = vsub.f32 %v996, %v1482
    %v1557 = vsub.f32 %v997, %v1484
    %v1558 = vsub.f32 %v998, %v1484
    %v1559 = vsub.f32 %v999, %v1484
    %v1560 = vsub.f32 %v1000, %v1484
    %v1561 = vsub.f32 %v1001, %v1484
    %v1562 = vsub.f32 %v1002, %v1484
    %v1563 = vsub.f32 %v1003, %v1484
    %v1564 = vsub.f32 %v1004, %v1484
    %v1565 = vsub.f32 %v1005, %v1486
    %v1566 = vsub.f32 %v1006, %v1486
    %v1567 = vsub.f32 %v1007, %v1486
    %v1568 = vsub.f32 %v1008, %v1486
    %v1569 = vsub.f32 %v1009, %v1486
    %v1570 = vsub.f32 %v1010, %v1486
    %v1571 = vsub.f32 %v1011, %v1486
    %v1572 = vsub.f32 %v1012, %v1486
    %v1573 = vsub.f32 %v1013, %v1488
    %v1574 = vsub.f32 %v1014, %v1488
    %v1575 = vsub.f32 %v1015, %v1488
    %v1576 = vsub.f32 %v1016, %v1488
    %v1577 = vsub.f32 %v1017, %v1488
    %v1578 = vsub.f32 %v1018, %v1488
    %v1579 = vsub.f32 %v1019, %v1488
    %v1580 = vsub.f32 %v1020, %v1488
    %v1581 = vsub.f32 %v1021, %v1490
    %v1582 = vsub.f32 %v1022, %v1490
    %v1583 = vsub.f32 %v1023, %v1490
    %v1584 = vsub.f32 %v1024, %v1490
    %v1585 = vsub.f32 %v1025, %v1490
    %v1586 = vsub.f32 %v1026, %v1490
    %v1587 = vsub.f32 %v1027, %v1490
    %v1588 = vsub.f32 %v1028, %v1490
    %v1589 = vsub.f32 %v1029, %v1492
    %v1590 = vsub.f32 %v1030, %v1492
    %v1591 = vsub.f32 %v1031, %v1492
    %v1592 = vsub.f32 %v1032, %v1492
    %v1593 = vsub.f32 %v1033, %v1492
    %v1594 = vsub.f32 %v1034, %v1492
    %v1595 = vsub.f32 %v1035, %v1492
    %v1596 = vsub.f32 %v1036, %v1492
    %v1597 = vsub.f32 %v1037, %v1494
    %v1598 = vsub.f32 %v1038, %v1494
    %v1599 = vsub.f32 %v1039, %v1494
    %v1600 = vsub.f32 %v1040, %v1494
    %v1601 = vsub.f32 %v1041, %v1494
    %v1602 = vsub.f32 %v1042, %v1494
    %v1603 = vsub.f32 %v1043, %v1494
    %v1604 = vsub.f32 %v1044, %v1494
    %v1605 = vsub.f32 %v1045, %v1496
    %v1606 = vsub.f32 %v1046, %v1496
    %v1607 = vsub.f32 %v1047, %v1496
    %v1608 = vsub.f32 %v1048, %v1496
    %v1609 = vsub.f32 %v1049, %v1496
    %v1610 = vsub.f32 %v1050, %v1496
    %v1611 = vsub.f32 %v1051, %v1496
    %v1612 = vsub.f32 %v1052, %v1496
    %v1613 = vsub.f32 %v1053, %v1498
    %v1614 = vsub.f32 %v1054, %v1498
    %v1615 = vsub.f32 %v1055, %v1498
    %v1616 = vsub.f32 %v1056, %v1498
    %v1617 = vsub.f32 %v1057, %v1498
    %v1618 = vsub.f32 %v1058, %v1498
    %v1619 = vsub.f32 %v1059, %v1498
    %v1620 = vsub.f32 %v1060, %v1498
    %v1621 = vsub.f32 %v1061, %v1500
    %v1622 = vsub.f32 %v1062, %v1500
    %v1623 = vsub.f32 %v1063, %v1500
    %v1624 = vsub.f32 %v1064, %v1500
    %v1625 = vsub.f32 %v1065, %v1500
    %v1626 = vsub.f32 %v1066, %v1500
    %v1627 = vsub.f32 %v1067, %v1500
    %v1628 = vsub.f32 %v1068, %v1500
    %1629 = vst [vmem:[#allocation5] sm:$0xff] %v1501
    %1630 = vst [vmem:[#allocation5 + $0x8] sm:$0xff] %v1502
    %1631 = vst [vmem:[#allocation5 + $0x10] sm:$0xff] %v1503
    %1632 = vst [vmem:[#allocation5 + $0x18] sm:$0xff] %v1504
    %1633 = vst [vmem:[#allocation5 + $0x20] sm:$0xff] %v1505
    %1634 = vst [vmem:[#allocation5 + $0x28] sm:$0xff] %v1506
    %1635 = vst [vmem:[#allocation5 + $0x30] sm:$0xff] %v1507
    %1636 = vst [vmem:[#allocation5 + $0x38] sm:$0xff] %v1508
    %1637 = vst [vmem:[#allocation5 + $0x40] sm:$0xff] %v1509
    %1638 = vst [vmem:[#allocation5 + $0x48] sm:$0xff] %v1510
    %1639 = vst [vmem:[#allocation5 + $0x50] sm:$0xff] %v1511
    %1640 = vst [vmem:[#allocation5 + $0x58] sm:$0xff] %v1512
    %1641 = vst [vmem:[#allocation5 + $0x60] sm:$0xff] %v1513
    %1642 = vst [vmem:[#allocation5 + $0x68] sm:$0xff] %v1514
    %1643 = vst [vmem:[#allocation5 + $0x70] sm:$0xff] %v1515
    %1644 = vst [vmem:[#allocation5 + $0x78] sm:$0xff] %v1516
    %1645 = vst [vmem:[#allocation5 + $0x80] sm:$0xff] %v1517
    %1646 = vst [vmem:[#allocation5 + $0x88] sm:$0xff] %v1518
    %1647 = vst [vmem:[#allocation5 + $0x90] sm:$0xff] %v1519
    %1648 = vst [vmem:[#allocation5 + $0x98] sm:$0xff] %v1520
    %1649 = vst [vmem:[#allocation5 + $0xa0] sm:$0xff] %v1521
    %1650 = vst [vmem:[#allocation5 + $0xa8] sm:$0xff] %v1522
    %1651 = vst [vmem:[#allocation5 + $0xb0] sm:$0xff] %v1523
    %1652 = vst [vmem:[#allocation5 + $0xb8] sm:$0xff] %v1524
    %1653 = vst [vmem:[#allocation5 + $0xc0] sm:$0xff] %v1525
    %1654 = vst [vmem:[#allocation5 + $0xc8] sm:$0xff] %v1526
    %1655 = vst [vmem:[#allocation5 + $0xd0] sm:$0xff] %v1527
    %1656 = vst [vmem:[#allocation5 + $0xd8] sm:$0xff] %v1528
    %1657 = vst [vmem:[#allocation5 + $0xe0] sm:$0xff] %v1529
    %1658 = vst [vmem:[#allocation5 + $0xe8] sm:$0xff] %v1530
    %1659 = vst [vmem:[#allocation5 + $0xf0] sm:$0xff] %v1531
    %1660 = vst [vmem:[#allocation5 + $0xf8] sm:$0xff] %v1532
    %1661 = vst [vmem:[#allocation5 + $0x100] sm:$0xff] %v1533
    %1662 = vst [vmem:[#allocation5 + $0x108] sm:$0xff] %v1534
    %1663 = vst [vmem:[#allocation5 + $0x110] sm:$0xff] %v1535
    %1664 = vst [vmem:[#allocation5 + $0x118] sm:$0xff] %v1536
    %1665 = vst [vmem:[#allocation5 + $0x120] sm:$0xff] %v1537
    %1666 = vst [vmem:[#allocation5 + $0x128] sm:$0xff] %v1538
    %1667 = vst [vmem:[#allocation5 + $0x130] sm:$0xff] %v1539
    %1668 = vst [vmem:[#allocation5 + $0x138] sm:$0xff] %v1540
    %1669 = vst [vmem:[#allocation5 + $0x140] sm:$0xff] %v1541
    %1670 = vst [vmem:[#allocation5 + $0x148] sm:$0xff] %v1542
    %1671 = vst [vmem:[#allocation5 + $0x150] sm:$0xff] %v1543
    %1672 = vst [vmem:[#allocation5 + $0x158] sm:$0xff] %v1544
    %1673 = vst [vmem:[#allocation5 + $0x160] sm:$0xff] %v1545
    %1674 = vst [vmem:[#allocation5 + $0x168] sm:$0xff] %v1546
    %1675 = vst [vmem:[#allocation5 + $0x170] sm:$0xff] %v1547
    %1676 = vst [vmem:[#allocation5 + $0x178] sm:$0xff] %v1548
    %1677 = vst [vmem:[#allocation5 + $0x180] sm:$0xff] %v1549
    %1678 = vst [vmem:[#allocation5 + $0x188] sm:$0xff] %v1550
    %1679 = vst [vmem:[#allocation5 + $0x190] sm:$0xff] %v1551
    %1680 = vst [vmem:[#allocation5 + $0x198] sm:$0xff] %v1552
    %1681 = vst [vmem:[#allocation5 + $0x1a0] sm:$0xff] %v1553
    %1682 = vst [vmem:[#allocation5 + $0x1a8] sm:$0xff] %v1554
    %1683 = vst [vmem:[#allocation5 + $0x1b0] sm:$0xff] %v1555
    %1684 = vst [vmem:[#allocation5 + $0x1b8] sm:$0xff] %v1556
    %1685 = vst [vmem:[#allocation5 + $0x1c0] sm:$0xff] %v1557
    %1686 = vst [vmem:[#allocation5 + $0x1c8] sm:$0xff] %v1558
    %1687 = vst [vmem:[#allocation5 + $0x1d0] sm:$0xff] %v1559
    %1688 = vst [vmem:[#allocation5 + $0x1d8] sm:$0xff] %v1560
    %1689 = vst [vmem:[#allocation5 + $0x1e0] sm:$0xff] %v1561
    %1690 = vst [vmem:[#allocation5 + $0x1e8] sm:$0xff] %v1562
    %1691 = vst [vmem:[#allocation5 + $0x1f0] sm:$0xff] %v1563
    %1692 = vst [vmem:[#allocation5 + $0x1f8] sm:$0xff] %v1564
    %1693 = vst [vmem:[#allocation5 + $0x200] sm:$0xff] %v1565
    %1694 = vst [vmem:[#allocation5 + $0x208] sm:$0xff] %v1566
    %1695 = vst [vmem:[#allocation5 + $0x210] sm:$0xff] %v1567
    %1696 = vst [vmem:[#allocation5 + $0x218] sm:$0xff] %v1568
    %1697 = vst [vmem:[#allocation5 + $0x220] sm:$0xff] %v1569
    %1698 = vst [vmem:[#allocation5 + $0x228] sm:$0xff] %v1570
    %1699 = vst [vmem:[#allocation5 + $0x230] sm:$0xff] %v1571
    %1700 = vst [vmem:[#allocation5 + $0x238] sm:$0xff] %v1572
    %1701 = vst [vmem:[#allocation5 + $0x240] sm:$0xff] %v1573
    %1702 = vst [vmem:[#allocation5 + $0x248] sm:$0xff] %v1574
    %1703 = vst [vmem:[#allocation5 + $0x250] sm:$0xff] %v1575
    %1704 = vst [vmem:[#allocation5 + $0x258] sm:$0xff] %v1576
    %1705 = vst [vmem:[#allocation5 + $0x260] sm:$0xff] %v1577
    %1706 = vst [vmem:[#allocation5 + $0x268] sm:$0xff] %v1578
    %1707 = vst [vmem:[#allocation5 + $0x270] sm:$0xff] %v1579
    %1708 = vst [vmem:[#allocation5 + $0x278] sm:$0xff] %v1580
    %1709 = vst [vmem:[#allocation5 + $0x280] sm:$0xff] %v1581
    %1710 = vst [vmem:[#allocation5 + $0x288] sm:$0xff] %v1582
    %1711 = vst [vmem:[#allocation5 + $0x290] sm:$0xff] %v1583
    %1712 = vst [vmem:[#allocation5 + $0x298] sm:$0xff] %v1584
    %1713 = vst [vmem:[#allocation5 + $0x2a0] sm:$0xff] %v1585
    %1714 = vst [vmem:[#allocation5 + $0x2a8] sm:$0xff] %v1586
    %1715 = vst [vmem:[#allocation5 + $0x2b0] sm:$0xff] %v1587
    %1716 = vst [vmem:[#allocation5 + $0x2b8] sm:$0xff] %v1588
    %1717 = vst [vmem:[#allocation5 + $0x2c0] sm:$0xff] %v1589
    %1718 = vst [vmem:[#allocation5 + $0x2c8] sm:$0xff] %v1590
    %1719 = vst [vmem:[#allocation5 + $0x2d0] sm:$0xff] %v1591
    %1720 = vst [vmem:[#allocation5 + $0x2d8] sm:$0xff] %v1592
    %1721 = vst [vmem:[#allocation5 + $0x2e0] sm:$0xff] %v1593
    %1722 = vst [vmem:[#allocation5 + $0x2e8] sm:$0xff] %v1594
    %1723 = vst [vmem:[#allocation5 + $0x2f0] sm:$0xff] %v1595
    %1724 = vst [vmem:[#allocation5 + $0x2f8] sm:$0xff] %v1596
    %1725 = vst [vmem:[#allocation5 + $0x300] sm:$0xff] %v1597
    %1726 = vst [vmem:[#allocation5 + $0x308] sm:$0xff] %v1598
    %1727 = vst [vmem:[#allocation5 + $0x310] sm:$0xff] %v1599
    %1728 = vst [vmem:[#allocation5 + $0x318] sm:$0xff] %v1600
    %1729 = vst [vmem:[#allocation5 + $0x320] sm:$0xff] %v1601
    %1730 = vst [vmem:[#allocation5 + $0x328] sm:$0xff] %v1602
    %1731 = vst [vmem:[#allocation5 + $0x330] sm:$0xff] %v1603
    %1732 = vst [vmem:[#allocation5 + $0x338] sm:$0xff] %v1604
    %1733 = vst [vmem:[#allocation5 + $0x340] sm:$0xff] %v1605
    %1734 = vst [vmem:[#allocation5 + $0x348] sm:$0xff] %v1606
    %1735 = vst [vmem:[#allocation5 + $0x350] sm:$0xff] %v1607
    %1736 = vst [vmem:[#allocation5 + $0x358] sm:$0xff] %v1608
    %1737 = vst [vmem:[#allocation5 + $0x360] sm:$0xff] %v1609
    %1738 = vst [vmem:[#allocation5 + $0x368] sm:$0xff] %v1610
    %1739 = vst [vmem:[#allocation5 + $0x370] sm:$0xff] %v1611
    %1740 = vst [vmem:[#allocation5 + $0x378] sm:$0xff] %v1612
    %1741 = vst [vmem:[#allocation5 + $0x380] sm:$0xff] %v1613
    %1742 = vst [vmem:[#allocation5 + $0x388] sm:$0xff] %v1614
    %1743 = vst [vmem:[#allocation5 + $0x390] sm:$0xff] %v1615
    %1744 = vst [vmem:[#allocation5 + $0x398] sm:$0xff] %v1616
    %1745 = vst [vmem:[#allocation5 + $0x3a0] sm:$0xff] %v1617
    %1746 = vst [vmem:[#allocation5 + $0x3a8] sm:$0xff] %v1618
    %1747 = vst [vmem:[#allocation5 + $0x3b0] sm:$0xff] %v1619
    %1748 = vst [vmem:[#allocation5 + $0x3b8] sm:$0xff] %v1620
    %1749 = vst [vmem:[#allocation5 + $0x3c0] sm:$0xff] %v1621
    %1750 = vst [vmem:[#allocation5 + $0x3c8] sm:$0xff] %v1622
    %1751 = vst [vmem:[#allocation5 + $0x3d0] sm:$0xff] %v1623
    %1752 = vst [vmem:[#allocation5 + $0x3d8] sm:$0xff] %v1624
    %1753 = vst [vmem:[#allocation5 + $0x3e0] sm:$0xff] %v1625
    %1754 = vst [vmem:[#allocation5 + $0x3e8] sm:$0xff] %v1626
    %1755 = vst [vmem:[#allocation5 + $0x3f0] sm:$0xff] %v1627
    %1756 = vst [vmem:[#allocation5 + $0x3f8] sm:$0xff] %v1628
    // Predicated region
    $region18: #{tpu_custom_call.1} parent=1 // pred_check
      _
    $region19: #{tpu_custom_call.1} parent=1 // pred_check_branch
      %1758 = sbr.rel (0) target = $region21
    $region20: #{tpu_custom_call.1} parent=1 // pred_region
      %s1760 = ssub.s32 16384, 16384
      %1761 = vsyncadd [#allocation4], %s1760
      %s1762 = sshll.u32 [#allocation5], 4
      %s1763 = int_to_ptr.vmem [resolvable:$true] %s1762
      %1768 = dma.vmem_to_hbm [thread:$0]  %s1763, 16384, %s3, [#allocation4], 1024, 1024, 64
    $region21: #{tpu_custom_call.1} parent=1 // pred_fallthru
      _
    // Predicated region
    $region22: #{tpu_custom_call.1} parent=1 // pred_check
      _
    $region23: #{tpu_custom_call.1} parent=1 // pred_check_branch
      %1770 = sbr.rel (0) target = $region25
    $region24: #{tpu_custom_call.1} parent=1 // pred_region
      %1771 = dma.done [#allocation4], 16384
    $region25: #{tpu_custom_call.1} parent=1 // pred_fallthru
      _
    %1772 = vsyncpa [#allocation3], 1
    %1773 = vsyncpa [#allocation4], 1

</llo_original>
